<compile_context>
chip_gen: v7x
topology: tpu7x:2x2x1
jax: 0.10.0
libtpu: 0.0.40
codegen_flags: <defaults>
</compile_context>

<pallas_src>
import jax
import jax.numpy as jnp
from jax.experimental import pallas as pl
from jax.experimental.pallas import tpu as pltpu

IN_DIM = 1 * 28 * 28                           # 784 (full last dim of x)
DIMS = [IN_DIM, 512, 256, 128, 64, 10]         # logical layer sizes (PyTorch Net)
PAD_DIMS = [IN_DIM, 512, 256, 128, 128, 128]   # padded widths: 64 -> 128, 10 -> 128
OUT_DIM = 10
OUT_PAD = PAD_DIMS[-1]


def _round_up(n, m):
    return (n + m - 1) // m * m


def _mlp_kernel(x_ref,
                w1_ref, b1_ref,
                w2_ref, b2_ref,
                w3_ref, b3_ref,
                w4_ref, b4_ref,
                w5_ref, b5_ref,
                o_ref):
    """relu(x@W1+b1) ... relu(.@W4+b4) @ W5 + b5.

    x arrives as f32 and is cast to bf16 in-kernel (VPU has slack).  All
    matmuls take bf16 inputs with f32 accumulation on the MXU; bias add and
    ReLU are f32.  Padded columns are zeros (ReLU-safe), so every store is
    lane-dense and unmasked.
    """
    h = jnp.dot(x_ref[...].astype(jnp.bfloat16), w1_ref[...],
                preferred_element_type=jnp.float32) + b1_ref[...]
    h = jnp.maximum(h, 0.0)

    h = jnp.dot(h.astype(jnp.bfloat16), w2_ref[...],
                preferred_element_type=jnp.float32) + b2_ref[...]
    h = jnp.maximum(h, 0.0)

    h = jnp.dot(h.astype(jnp.bfloat16), w3_ref[...],
                preferred_element_type=jnp.float32) + b3_ref[...]
    h = jnp.maximum(h, 0.0)

    h = jnp.dot(h.astype(jnp.bfloat16), w4_ref[...],
                preferred_element_type=jnp.float32) + b4_ref[...]
    h = jnp.maximum(h, 0.0)

    h = jnp.dot(h.astype(jnp.bfloat16), w5_ref[...],
                preferred_element_type=jnp.float32) + b5_ref[...]

    o_ref[...] = h


def prepare_params(params):
    """One-time parameter prep (hoisted out of the per-call hot path).

    params: list of (W, b) with W shape (in, out) (transpose of torch layout),
            b shape (out,).
    Returns a flat tuple of padded bf16 weights and padded f32 (1, out) biases.
    Padding is zeros, which is exact under ReLU and contributes nothing to the
    following matmuls.
    """
    flat = []
    for i, (w, b) in enumerate(params):
        in_d, out_d = w.shape
        in_p, out_p = PAD_DIMS[i], PAD_DIMS[i + 1]
        w_p = (jnp.zeros((in_p, out_p), jnp.float32)
               .at[:in_d, :out_d].set(w.astype(jnp.float32))
               .astype(jnp.bfloat16))
        b_p = (jnp.zeros((1, out_p), jnp.float32)
               .at[0, :out_d].set(b.astype(jnp.float32)))
        flat.append(w_p)
        flat.append(b_p)
    return tuple(flat)


def _pick_tile_b(B):
    if B >= 4096:
        return 2048                                # many big tiles
    if B >= 32:
        # At least 2 tiles so the "parallel" axis feeds both v7x TensorCores.
        return _round_up(pl.cdiv(B, 2), 8)          # multiple of 8, <= B
    return B                                        # single tile == full batch


def net_forward(x_nchw, prepared, *, tile_b=None):
    """Fused MLP forward.

    x_nchw:   (B, 1, 28, 28) float32
    prepared: output of prepare_params (bf16 padded weights, f32 biases)
    returns   (B, 10) float32 logits
    """
    B = x_nchw.shape[0]
    # nn.Flatten: free row-major reshape, stays f32 (no extra HBM pass).
    x = x_nchw.reshape(B, IN_DIM)

    if tile_b is None:
        tile_b = _pick_tile_b(B)
    tile_b = min(tile_b, B)
    if tile_b != B and tile_b % 8 != 0:
        tile_b = _round_up(tile_b, 8)

    grid = (pl.cdiv(B, tile_b),)

    # x block: last dim 784 equals the full array dim (legal); first dim is a
    # multiple of 8 (or the full batch).  Partial last tile reads garbage rows
    # that are never written back.
    x_spec = pl.BlockSpec((tile_b, IN_DIM), lambda i: (i, 0))
    # Weights/biases: same block every grid step -> stay VMEM-resident.
    param_specs = [pl.BlockSpec(p.shape, lambda i: (0, 0)) for p in prepared]
    out_spec = pl.BlockSpec((tile_b, OUT_PAD), lambda i: (i, 0))

    out = pl.pallas_call(
        _mlp_kernel,
        out_shape=jax.ShapeDtypeStruct((B, OUT_PAD), jnp.float32),
        grid=grid,
        in_specs=[x_spec] + param_specs,
        out_specs=out_spec,
        compiler_params=pltpu.CompilerParams(
            dimension_semantics=("parallel",),      # megacore split on v7x
            vmem_limit_bytes=48 * 1024 * 1024),     # room for tile_b up to 2048
    )(x, *prepared)

    return out[:, :OUT_DIM]


def init_params(key):
    """Deterministic init matching nn.Linear's uniform(-1/sqrt(fan_in), +)."""
    params = []
    for i in range(len(DIMS) - 1):
        fan_in, fan_out = DIMS[i], DIMS[i + 1]
        key, kw, kb = jax.random.split(key, 3)
        bound = 1.0 / jnp.sqrt(float(fan_in))
        # Stored as (in, out): transpose of torch layout, so kernel does x @ W.
        w = jax.random.uniform(kw, (fan_in, fan_out), jnp.float32, -bound, bound)
        b = jax.random.uniform(kb, (fan_out,), jnp.float32, -bound, bound)
        params.append((w, b))
    return params


def reference_forward(x_nchw, params):
    """Pure-JAX reference with the same numerics (bf16 matmul in, f32 acc)."""
    h = x_nchw.reshape(x_nchw.shape[0], -1).astype(jnp.float32)
    for i, (w, b) in enumerate(params):
        h = jnp.dot(h.astype(jnp.bfloat16), w.astype(jnp.bfloat16),
                    preferred_element_type=jnp.float32) + b.astype(jnp.float32)
        if i < len(params) - 1:
            h = jnp.maximum(h, 0.0)
    return h


if __name__ == "__main__":
    key = jax.random.PRNGKey(0)
    key, kx1, kx2 = jax.random.split(key, 3)
    params = init_params(key)

    # One-time parameter prep (bf16 cast + width padding), outside the hot path.
    prepared = prepare_params(params)

    fwd = jax.jit(net_forward, static_argnames=("tile_b",))

    # Small batch (single grid step, tile == full batch).
    x = jax.random.normal(kx1, (8, 1, 28, 28), jnp.float32)
    out = jax.block_until_ready(fwd(x, prepared))
    ref = reference_forward(x, params)
    assert out.shape == (8, 10)
    assert jnp.allclose(out, ref, atol=1e-2, rtol=1e-2)

    # Multi-tile batch: default split (2 tiles) and a partial last tile
    # (tile_b=40 -> grid=(3,), last tile has 16 valid rows) to exercise the
    # cdiv grid / masked output writeback / resident-weight index maps.
    x2 = jax.random.normal(kx2, (96, 1, 28, 28), jnp.float32)
    ref2 = reference_forward(x2, params)

    out2 = jax.block_until_ready(fwd(x2, prepared))            # grid=(2,)
    assert out2.shape == (96, 10)
    assert jnp.allclose(out2, ref2, atol=1e-2, rtol=1e-2)

    out3 = jax.block_until_ready(fwd(x2, prepared, tile_b=40))  # grid=(3,), partial tile
    assert out3.shape == (96, 10)
    assert jnp.allclose(out3, ref2, atol=1e-2, rtol=1e-2)

    print("KERNEL_OK")
</pallas_src>

<mosaic_0001>
module attributes {stable_mosaic.version = 11 : i64} {
  func.func @_mlp_kernel(%arg0: i32, %arg1: memref<8x784xf32, #tpu.memory_space<vmem>>, %arg2: memref<784x512xbf16, #tpu.memory_space<vmem>>, %arg3: memref<1x512xf32, #tpu.memory_space<vmem>>, %arg4: memref<512x256xbf16, #tpu.memory_space<vmem>>, %arg5: memref<1x256xf32, #tpu.memory_space<vmem>>, %arg6: memref<256x128xbf16, #tpu.memory_space<vmem>>, %arg7: memref<1x128xf32, #tpu.memory_space<vmem>>, %arg8: memref<128x128xbf16, #tpu.memory_space<vmem>>, %arg9: memref<1x128xf32, #tpu.memory_space<vmem>>, %arg10: memref<128x128xbf16, #tpu.memory_space<vmem>>, %arg11: memref<1x128xf32, #tpu.memory_space<vmem>>, %arg12: memref<8x128xf32, #tpu.memory_space<vmem>>) attributes {dimension_semantics = [#tpu.dimension_semantics<parallel>], iteration_bounds = array<i64: 1>, scalar_prefetch = 0 : i64, scratch_operands = 0 : i64, tpu.core_type = #tpu.core_type<tc>, window_params = [{transform_indices = @transform_0, window_bounds = array<i64: 8, 784>}, {pipeline_mode = #tpu.pipeline_mode<synchronous>, transform_indices = @transform_1, window_bounds = array<i64: 784, 512>}, {pipeline_mode = #tpu.pipeline_mode<synchronous>, transform_indices = @transform_2, window_bounds = array<i64: 1, 512>}, {pipeline_mode = #tpu.pipeline_mode<synchronous>, transform_indices = @transform_3, window_bounds = array<i64: 512, 256>}, {pipeline_mode = #tpu.pipeline_mode<synchronous>, transform_indices = @transform_4, window_bounds = array<i64: 1, 256>}, {pipeline_mode = #tpu.pipeline_mode<synchronous>, transform_indices = @transform_5, window_bounds = array<i64: 256, 128>}, {pipeline_mode = #tpu.pipeline_mode<synchronous>, transform_indices = @transform_6, window_bounds = array<i64: 1, 128>}, {pipeline_mode = #tpu.pipeline_mode<synchronous>, transform_indices = @transform_7, window_bounds = array<i64: 128, 128>}, {pipeline_mode = #tpu.pipeline_mode<synchronous>, transform_indices = @transform_8, window_bounds = array<i64: 1, 128>}, {pipeline_mode = #tpu.pipeline_mode<synchronous>, transform_indices = @transform_9, window_bounds = array<i64: 128, 128>}, {pipeline_mode = #tpu.pipeline_mode<synchronous>, transform_indices = @transform_10, window_bounds = array<i64: 1, 128>}, {transform_indices = @transform_11, window_bounds = array<i64: 8, 128>}]} {
    %c0 = arith.constant 0 : index
    %c0_0 = arith.constant 0 : index
    %0 = vector.load %arg1[%c0, %c0_0] : memref<8x784xf32, #tpu.memory_space<vmem>>, vector<8x784xf32>
    %1 = arith.truncf %0 : vector<8x784xf32> to vector<8x784xbf16>
    %c0_1 = arith.constant 0 : index
    %c0_2 = arith.constant 0 : index
    %2 = vector.load %arg2[%c0_1, %c0_2] : memref<784x512xbf16, #tpu.memory_space<vmem>>, vector<784x512xbf16>
    %cst = arith.constant dense<0.000000e+00> : vector<8x512xf32>
    %3 = tpu.matmul %1, %2, %cst {dimension_numbers = #tpu.dot_dimension_numbers<[1], [0], [0], [1], [0, 0, 1, 1], [], []>} : vector<8x784xbf16>, vector<784x512xbf16>, vector<8x512xf32> -> vector<8x512xf32>
    %c0_3 = arith.constant 0 : index
    %c0_4 = arith.constant 0 : index
    %4 = vector.load %arg3[%c0_3, %c0_4] : memref<1x512xf32, #tpu.memory_space<vmem>>, vector<1x512xf32>
    %5 = vector.broadcast %4 : vector<1x512xf32> to vector<8x512xf32>
    %6 = arith.addf %3, %5 : vector<8x512xf32>
    %cst_5 = arith.constant 0.000000e+00 : f32
    %7 = vector.broadcast %cst_5 : f32 to vector<8x512xf32>
    %8 = arith.maximumf %6, %7 : vector<8x512xf32>
    %9 = arith.truncf %8 : vector<8x512xf32> to vector<8x512xbf16>
    %c0_6 = arith.constant 0 : index
    %c0_7 = arith.constant 0 : index
    %10 = vector.load %arg4[%c0_6, %c0_7] : memref<512x256xbf16, #tpu.memory_space<vmem>>, vector<512x256xbf16>
    %cst_8 = arith.constant dense<0.000000e+00> : vector<8x256xf32>
    %11 = tpu.matmul %9, %10, %cst_8 {dimension_numbers = #tpu.dot_dimension_numbers<[1], [0], [0], [1], [0, 0, 1, 1], [], []>} : vector<8x512xbf16>, vector<512x256xbf16>, vector<8x256xf32> -> vector<8x256xf32>
    %c0_9 = arith.constant 0 : index
    %c0_10 = arith.constant 0 : index
    %12 = vector.load %arg5[%c0_9, %c0_10] : memref<1x256xf32, #tpu.memory_space<vmem>>, vector<1x256xf32>
    %13 = vector.broadcast %12 : vector<1x256xf32> to vector<8x256xf32>
    %14 = arith.addf %11, %13 : vector<8x256xf32>
    %cst_11 = arith.constant 0.000000e+00 : f32
    %15 = vector.broadcast %cst_11 : f32 to vector<8x256xf32>
    %16 = arith.maximumf %14, %15 : vector<8x256xf32>
    %17 = arith.truncf %16 : vector<8x256xf32> to vector<8x256xbf16>
    %c0_12 = arith.constant 0 : index
    %c0_13 = arith.constant 0 : index
    %18 = vector.load %arg6[%c0_12, %c0_13] : memref<256x128xbf16, #tpu.memory_space<vmem>>, vector<256x128xbf16>
    %cst_14 = arith.constant dense<0.000000e+00> : vector<8x128xf32>
    %19 = tpu.matmul %17, %18, %cst_14 {dimension_numbers = #tpu.dot_dimension_numbers<[1], [0], [0], [1], [0, 0, 1, 1], [], []>} : vector<8x256xbf16>, vector<256x128xbf16>, vector<8x128xf32> -> vector<8x128xf32>
    %c0_15 = arith.constant 0 : index
    %c0_16 = arith.constant 0 : index
    %20 = vector.load %arg7[%c0_15, %c0_16] : memref<1x128xf32, #tpu.memory_space<vmem>>, vector<1x128xf32>
    %21 = vector.broadcast %20 : vector<1x128xf32> to vector<8x128xf32>
    %22 = arith.addf %19, %21 : vector<8x128xf32>
    %cst_17 = arith.constant 0.000000e+00 : f32
    %23 = vector.broadcast %cst_17 : f32 to vector<8x128xf32>
    %24 = arith.maximumf %22, %23 : vector<8x128xf32>
    %25 = arith.truncf %24 : vector<8x128xf32> to vector<8x128xbf16>
    %c0_18 = arith.constant 0 : index
    %c0_19 = arith.constant 0 : index
    %26 = vector.load %arg8[%c0_18, %c0_19] : memref<128x128xbf16, #tpu.memory_space<vmem>>, vector<128x128xbf16>
    %cst_20 = arith.constant dense<0.000000e+00> : vector<8x128xf32>
    %27 = tpu.matmul %25, %26, %cst_20 {dimension_numbers = #tpu.dot_dimension_numbers<[1], [0], [0], [1], [0, 0, 1, 1], [], []>} : vector<8x128xbf16>, vector<128x128xbf16>, vector<8x128xf32> -> vector<8x128xf32>
    %c0_21 = arith.constant 0 : index
    %c0_22 = arith.constant 0 : index
    %28 = vector.load %arg9[%c0_21, %c0_22] : memref<1x128xf32, #tpu.memory_space<vmem>>, vector<1x128xf32>
    %29 = vector.broadcast %28 : vector<1x128xf32> to vector<8x128xf32>
    %30 = arith.addf %27, %29 : vector<8x128xf32>
    %cst_23 = arith.constant 0.000000e+00 : f32
    %31 = vector.broadcast %cst_23 : f32 to vector<8x128xf32>
    %32 = arith.maximumf %30, %31 : vector<8x128xf32>
    %33 = arith.truncf %32 : vector<8x128xf32> to vector<8x128xbf16>
    %c0_24 = arith.constant 0 : index
    %c0_25 = arith.constant 0 : index
    %34 = vector.load %arg10[%c0_24, %c0_25] : memref<128x128xbf16, #tpu.memory_space<vmem>>, vector<128x128xbf16>
    %cst_26 = arith.constant dense<0.000000e+00> : vector<8x128xf32>
    %35 = tpu.matmul %33, %34, %cst_26 {dimension_numbers = #tpu.dot_dimension_numbers<[1], [0], [0], [1], [0, 0, 1, 1], [], []>} : vector<8x128xbf16>, vector<128x128xbf16>, vector<8x128xf32> -> vector<8x128xf32>
    %c0_27 = arith.constant 0 : index
    %c0_28 = arith.constant 0 : index
    %36 = vector.load %arg11[%c0_27, %c0_28] : memref<1x128xf32, #tpu.memory_space<vmem>>, vector<1x128xf32>
    %37 = vector.broadcast %36 : vector<1x128xf32> to vector<8x128xf32>
    %38 = arith.addf %35, %37 : vector<8x128xf32>
    %c0_29 = arith.constant 0 : index
    %c0_30 = arith.constant 0 : index
    %39 = vector.load %arg12[%c0_29, %c0_30] : memref<8x128xf32, #tpu.memory_space<vmem>>, vector<8x128xf32>
    tpu.vector_store %arg12[%c0_29, %c0_30], %38 {strides = array<i32>} : memref<8x128xf32, #tpu.memory_space<vmem>>, vector<8x128xf32>,
    return
  }
  func.func @transform_0(%arg0: i32) -> (i32, i32) {
    %c0_i32 = arith.constant 0 : i32
    %c0_i32_0 = arith.constant 0 : i32
    return %arg0, %c0_i32 : i32, i32
  }
  func.func @transform_1(%arg0: i32) -> (i32, i32) {
    %c0_i32 = arith.constant 0 : i32
    %c0_i32_0 = arith.constant 0 : i32
    %c0_i32_1 = arith.constant 0 : i32
    return %c0_i32, %c0_i32_0 : i32, i32
  }
  func.func @transform_2(%arg0: i32) -> (i32, i32) {
    %c0_i32 = arith.constant 0 : i32
    %c0_i32_0 = arith.constant 0 : i32
    %c0_i32_1 = arith.constant 0 : i32
    return %c0_i32, %c0_i32_0 : i32, i32
  }
  func.func @transform_3(%arg0: i32) -> (i32, i32) {
    %c0_i32 = arith.constant 0 : i32
    %c0_i32_0 = arith.constant 0 : i32
    %c0_i32_1 = arith.constant 0 : i32
    return %c0_i32, %c0_i32_0 : i32, i32
  }
  func.func @transform_4(%arg0: i32) -> (i32, i32) {
    %c0_i32 = arith.constant 0 : i32
    %c0_i32_0 = arith.constant 0 : i32
    %c0_i32_1 = arith.constant 0 : i32
    return %c0_i32, %c0_i32_0 : i32, i32
  }
  func.func @transform_5(%arg0: i32) -> (i32, i32) {
    %c0_i32 = arith.constant 0 : i32
    %c0_i32_0 = arith.constant 0 : i32
    %c0_i32_1 = arith.constant 0 : i32
    return %c0_i32, %c0_i32_0 : i32, i32
  }
  func.func @transform_6(%arg0: i32) -> (i32, i32) {
    %c0_i32 = arith.constant 0 : i32
    %c0_i32_0 = arith.constant 0 : i32
    %c0_i32_1 = arith.constant 0 : i32
    return %c0_i32, %c0_i32_0 : i32, i32
  }
  func.func @transform_7(%arg0: i32) -> (i32, i32) {
    %c0_i32 = arith.constant 0 : i32
    %c0_i32_0 = arith.constant 0 : i32
    %c0_i32_1 = arith.constant 0 : i32
    return %c0_i32, %c0_i32_0 : i32, i32
  }
  func.func @transform_8(%arg0: i32) -> (i32, i32) {
    %c0_i32 = arith.constant 0 : i32
    %c0_i32_0 = arith.constant 0 : i32
    %c0_i32_1 = arith.constant 0 : i32
    return %c0_i32, %c0_i32_0 : i32, i32
  }
  func.func @transform_9(%arg0: i32) -> (i32, i32) {
    %c0_i32 = arith.constant 0 : i32
    %c0_i32_0 = arith.constant 0 : i32
    %c0_i32_1 = arith.constant 0 : i32
    return %c0_i32, %c0_i32_0 : i32, i32
  }
  func.func @transform_10(%arg0: i32) -> (i32, i32) {
    %c0_i32 = arith.constant 0 : i32
    %c0_i32_0 = arith.constant 0 : i32
    %c0_i32_1 = arith.constant 0 : i32
    return %c0_i32, %c0_i32_0 : i32, i32
  }
  func.func @transform_11(%arg0: i32) -> (i32, i32) {
    %c0_i32 = arith.constant 0 : i32
    %c0_i32_0 = arith.constant 0 : i32
    return %arg0, %c0_i32 : i32, i32
  }
}

</mosaic_0001>

<llo_original>
// kernel: net_forward.1
$region0: #{net_forward.1}
  #allocation0 [shape = 'u32[]', space=smem, size = 0x4, offset = 0x4, fixed_abs, tag = 'smem constant byte address 0x4 - core index']
  #allocation1 [shape = 'u32[144,128]{1,0:T(1,128)}', space=vmem, size = 0x12000, scoped, tag = 'internal scratch']
  %s0 = inlined_call_operand.vmem [shape: f32[8,784], index: 0, kind: input, shape index: {}]
  %s1 = inlined_call_operand.hbm [shape: bf16[784,512], index: 1, kind: input, shape index: {}]
  %s2 = inlined_call_operand.vmem [shape: f32[1,512], index: 2, kind: input, shape index: {}]
  %s3 = inlined_call_operand.vmem [shape: bf16[512,256], index: 3, kind: input, shape index: {}]
  %s4 = inlined_call_operand.vmem [shape: f32[1,256], index: 4, kind: input, shape index: {}]
  %s5 = inlined_call_operand.vmem [shape: bf16[256,128], index: 5, kind: input, shape index: {}]
  %s6 = inlined_call_operand.vmem [shape: f32[1,128], index: 6, kind: input, shape index: {}]
  %s7 = inlined_call_operand.vmem [shape: bf16[128,128], index: 7, kind: input, shape index: {}]
  %s8 = inlined_call_operand.vmem [shape: f32[1,128], index: 8, kind: input, shape index: {}]
  %s9 = inlined_call_operand.vmem [shape: bf16[128,128], index: 9, kind: input, shape index: {}]
  %s10 = inlined_call_operand.vmem [shape: f32[1,128], index: 10, kind: input, shape index: {}]
  %s11 = inlined_call_operand.hbm [shape: f32[8,128], index: 11, kind: output, shape index: {}]
  %s12 = sld [smem:[#allocation0]]
  $region58: #{net_forward.1} parent=0
    _
  %s14 = ssub.s32 1, %s12
  %s15 = scalar_select 0, %s14, %s12
  $region1: #{net_forward.1} parent=0
    #allocation2 [shape = 'u8[802816]{0}', space=vmem, size = 0xc4000, scoped, tag = 'input window, operand 1, single buffered']
    #allocation3 [shape = 's32[1]{0}', space=sflag, size = 0x4, scoped, tag = 'scoped memory for net_forward.1']
    #allocation4 [shape = 's32[1]{0}', space=sflag, size = 0x4, scoped, tag = 'scoped memory for net_forward.1']
    #allocation5 [shape = 'u8[4096]{0}', space=vmem, size = 0x1000, scoped, tag = 'output window, operand 0, single buffered']
    %16 = vsyncpa [#allocation3], 0
    %17 = vsyncpa [#allocation4], 0
    // Predicated region
    $region2: #{net_forward.1} parent=1 // pred_check
      _
    $region3: #{net_forward.1} parent=1 // pred_check_branch
      %19 = sbr.rel (0) target = $region5
    $region4: #{net_forward.1} parent=1 // pred_region
      _
    $region5: #{net_forward.1} parent=1 // pred_fallthru
      _
    // Predicated region
    $region6: #{net_forward.1} parent=1 // pred_check
      _
    $region7: #{net_forward.1} parent=1 // pred_check_branch
      %21 = sbr.rel (0) target = $region9
    $region8: #{net_forward.1} parent=1 // pred_region
      %s23 = ssub.s32 25088, 25088
      %24 = vsyncadd [#allocation3], %s23
      %s25 = sshll.u32 [#allocation2], 4
      %s26 = int_to_ptr.vmem [resolvable:$true] %s25
      %31 = dma.hbm_to_vmem [thread:$0]  %s1, 25088, %s26, [#allocation3], 256, 256, 16
    $region9: #{net_forward.1} parent=1 // pred_fallthru
      _
    // Predicated region
    $region10: #{net_forward.1} parent=1 // pred_check
      _
    $region11: #{net_forward.1} parent=1 // pred_check_branch
      %33 = sbr.rel (0) target = $region13
    $region12: #{net_forward.1} parent=1 // pred_region
      _
    $region13: #{net_forward.1} parent=1 // pred_fallthru
      _
    // Predicated region
    $region14: #{net_forward.1} parent=1 // pred_check
      _
    $region15: #{net_forward.1} parent=1 // pred_check_branch
      %35 = sbr.rel (0) target = $region17
    $region16: #{net_forward.1} parent=1 // pred_region
      _
    $region17: #{net_forward.1} parent=1 // pred_fallthru
      _
    // Predicated region
    $region18: #{net_forward.1} parent=1 // pred_check
      _
    $region19: #{net_forward.1} parent=1 // pred_check_branch
      %37 = sbr.rel (0) target = $region21
    $region20: #{net_forward.1} parent=1 // pred_region
      _
    $region21: #{net_forward.1} parent=1 // pred_fallthru
      _
    // Predicated region
    $region22: #{net_forward.1} parent=1 // pred_check
      _
    $region23: #{net_forward.1} parent=1 // pred_check_branch
      %39 = sbr.rel (0) target = $region25
    $region24: #{net_forward.1} parent=1 // pred_region
      _
    $region25: #{net_forward.1} parent=1 // pred_fallthru
      _
    // Predicated region
    $region26: #{net_forward.1} parent=1 // pred_check
      _
    $region27: #{net_forward.1} parent=1 // pred_check_branch
      %41 = sbr.rel (0) target = $region29
    $region28: #{net_forward.1} parent=1 // pred_region
      _
    $region29: #{net_forward.1} parent=1 // pred_fallthru
      _
    // Predicated region
    $region30: #{net_forward.1} parent=1 // pred_check
      _
    $region31: #{net_forward.1} parent=1 // pred_check_branch
      %43 = sbr.rel (0) target = $region33
    $region32: #{net_forward.1} parent=1 // pred_region
      _
    $region33: #{net_forward.1} parent=1 // pred_fallthru
      _
    // Predicated region
    $region34: #{net_forward.1} parent=1 // pred_check
      _
    $region35: #{net_forward.1} parent=1 // pred_check_branch
      %45 = sbr.rel (0) target = $region37
    $region36: #{net_forward.1} parent=1 // pred_region
      _
    $region37: #{net_forward.1} parent=1 // pred_fallthru
      _
    // Predicated region
    $region38: #{net_forward.1} parent=1 // pred_check
      _
    $region39: #{net_forward.1} parent=1 // pred_check_branch
      %47 = sbr.rel (0) target = $region41
    $region40: #{net_forward.1} parent=1 // pred_region
      _
    $region41: #{net_forward.1} parent=1 // pred_fallthru
      _
    // Predicated region
    $region42: #{net_forward.1} parent=1 // pred_check
      _
    $region43: #{net_forward.1} parent=1 // pred_check_branch
      %49 = sbr.rel (0) target = $region45
    $region44: #{net_forward.1} parent=1 // pred_region
      _
    $region45: #{net_forward.1} parent=1 // pred_fallthru
      _
    // Predicated region
    $region46: #{net_forward.1} parent=1 // pred_check
      _
    $region47: #{net_forward.1} parent=1 // pred_check_branch
      %51 = sbr.rel (0) target = $region49
    $region48: #{net_forward.1} parent=1 // pred_region
      %52 = dma.done [#allocation3], 25088
    $region49: #{net_forward.1} parent=1 // pred_fallthru
      _
    %v54 = vld [vmem:[%s0] sm:$0xff]
    %v55 = vld [vmem:[%s0 + $0x8] sm:$0xff]
    %v56 = vld [vmem:[%s0 + $0x10] sm:$0xff]
    %v57 = vld [vmem:[%s0 + $0x18] sm:$0xff]
    %v58 = vld [vmem:[%s0 + $0x20] sm:$0xff]
    %v59 = vld [vmem:[%s0 + $0x28] sm:$0xff]
    %v60 = vld [vmem:[%s0 + $0x30] sm:$0xff]
    %v61 = vpack.c.bf16 %v54, %v54
    %v62 = vpack.c.bf16 %v55, %v55
    %v63 = vpack.c.bf16 %v56, %v56
    %v64 = vpack.c.bf16 %v57, %v57
    %v65 = vpack.c.bf16 %v58, %v58
    %v66 = vpack.c.bf16 %v59, %v59
    %v67 = vpack.c.bf16 %v60, %v60
    %v68 = vld [vmem:[#allocation2] sm:$0xff]
    %v69 = vld [vmem:[#allocation2 + $0x8] sm:$0xff]
    %v70 = vld [vmem:[#allocation2 + $0x10] sm:$0xff]
    %v71 = vld [vmem:[#allocation2 + $0x18] sm:$0xff]
    %v72 = vld [vmem:[#allocation2 + $0x20] sm:$0xff]
    %v73 = vld [vmem:[#allocation2 + $0x28] sm:$0xff]
    %v74 = vld [vmem:[#allocation2 + $0x30] sm:$0xff]
    %v75 = vld [vmem:[#allocation2 + $0x38] sm:$0xff]
    %v76 = vld [vmem:[#allocation2 + $0x40] sm:$0xff]
    %v77 = vld [vmem:[#allocation2 + $0x48] sm:$0xff]
    %v78 = vld [vmem:[#allocation2 + $0x50] sm:$0xff]
    %v79 = vld [vmem:[#allocation2 + $0x58] sm:$0xff]
    %v80 = vld [vmem:[#allocation2 + $0x60] sm:$0xff]
    %v81 = vld [vmem:[#allocation2 + $0x68] sm:$0xff]
    %v82 = vld [vmem:[#allocation2 + $0x70] sm:$0xff]
    %v83 = vld [vmem:[#allocation2 + $0x78] sm:$0xff]
    %v84 = vld [vmem:[#allocation2 + $0x80] sm:$0xff]
    %v85 = vld [vmem:[#allocation2 + $0x88] sm:$0xff]
    %v86 = vld [vmem:[#allocation2 + $0x90] sm:$0xff]
    %v87 = vld [vmem:[#allocation2 + $0x98] sm:$0xff]
    %v88 = vld [vmem:[#allocation2 + $0xa0] sm:$0xff]
    %v89 = vld [vmem:[#allocation2 + $0xa8] sm:$0xff]
    %v90 = vld [vmem:[#allocation2 + $0xb0] sm:$0xff]
    %v91 = vld [vmem:[#allocation2 + $0xb8] sm:$0xff]
    %v92 = vld [vmem:[#allocation2 + $0xc0] sm:$0xff]
    %v93 = vld [vmem:[#allocation2 + $0xc8] sm:$0xff]
    %v94 = vld [vmem:[#allocation2 + $0xd0] sm:$0xff]
    %v95 = vld [vmem:[#allocation2 + $0xd8] sm:$0xff]
    %v96 = vld [vmem:[#allocation2 + $0xe0] sm:$0xff]
    %v97 = vld [vmem:[#allocation2 + $0xe8] sm:$0xff]
    %v98 = vld [vmem:[#allocation2 + $0xf0] sm:$0xff]
    %v99 = vld [vmem:[#allocation2 + $0xf8] sm:$0xff]
    %v100 = vld [vmem:[#allocation2 + $0x100] sm:$0xff]
    %v101 = vld [vmem:[#allocation2 + $0x108] sm:$0xff]
    %v102 = vld [vmem:[#allocation2 + $0x110] sm:$0xff]
    %v103 = vld [vmem:[#allocation2 + $0x118] sm:$0xff]
    %v104 = vld [vmem:[#allocation2 + $0x120] sm:$0xff]
    %v105 = vld [vmem:[#allocation2 + $0x128] sm:$0xff]
    %v106 = vld [vmem:[#allocation2 + $0x130] sm:$0xff]
    %v107 = vld [vmem:[#allocation2 + $0x138] sm:$0xff]
    %v108 = vld [vmem:[#allocation2 + $0x140] sm:$0xff]
    %v109 = vld [vmem:[#allocation2 + $0x148] sm:$0xff]
    %v110 = vld [vmem:[#allocation2 + $0x150] sm:$0xff]
    %v111 = vld [vmem:[#allocation2 + $0x158] sm:$0xff]
    %v112 = vld [vmem:[#allocation2 + $0x160] sm:$0xff]
    %v113 = vld [vmem:[#allocation2 + $0x168] sm:$0xff]
    %v114 = vld [vmem:[#allocation2 + $0x170] sm:$0xff]
    %v115 = vld [vmem:[#allocation2 + $0x178] sm:$0xff]
    %v116 = vld [vmem:[#allocation2 + $0x180] sm:$0xff]
    %v117 = vld [vmem:[#allocation2 + $0x188] sm:$0xff]
    %v118 = vld [vmem:[#allocation2 + $0x190] sm:$0xff]
    %v119 = vld [vmem:[#allocation2 + $0x198] sm:$0xff]
    %v120 = vld [vmem:[#allocation2 + $0x1a0] sm:$0xff]
    %v121 = vld [vmem:[#allocation2 + $0x1a8] sm:$0xff]
    %v122 = vld [vmem:[#allocation2 + $0x1b0] sm:$0xff]
    %v123 = vld [vmem:[#allocation2 + $0x1b8] sm:$0xff]
    %v124 = vld [vmem:[#allocation2 + $0x1c0] sm:$0xff]
    %v125 = vld [vmem:[#allocation2 + $0x1c8] sm:$0xff]
    %v126 = vld [vmem:[#allocation2 + $0x1d0] sm:$0xff]
    %v127 = vld [vmem:[#allocation2 + $0x1d8] sm:$0xff]
    %v128 = vld [vmem:[#allocation2 + $0x1e0] sm:$0xff]
    %v129 = vld [vmem:[#allocation2 + $0x1e8] sm:$0xff]
    %v130 = vld [vmem:[#allocation2 + $0x1f0] sm:$0xff]
    %v131 = vld [vmem:[#allocation2 + $0x1f8] sm:$0xff]
    %v132 = vld [vmem:[#allocation2 + $0x200] sm:$0xff]
    %v133 = vld [vmem:[#allocation2 + $0x208] sm:$0xff]
    %v134 = vld [vmem:[#allocation2 + $0x210] sm:$0xff]
    %v135 = vld [vmem:[#allocation2 + $0x218] sm:$0xff]
    %v136 = vld [vmem:[#allocation2 + $0x220] sm:$0xff]
    %v137 = vld [vmem:[#allocation2 + $0x228] sm:$0xff]
    %v138 = vld [vmem:[#allocation2 + $0x230] sm:$0xff]
    %v139 = vld [vmem:[#allocation2 + $0x238] sm:$0xff]
    %v140 = vld [vmem:[#allocation2 + $0x240] sm:$0xff]
    %v141 = vld [vmem:[#allocation2 + $0x248] sm:$0xff]
    %v142 = vld [vmem:[#allocation2 + $0x250] sm:$0xff]
    %v143 = vld [vmem:[#allocation2 + $0x258] sm:$0xff]
    %v144 = vld [vmem:[#allocation2 + $0x260] sm:$0xff]
    %v145 = vld [vmem:[#allocation2 + $0x268] sm:$0xff]
    %v146 = vld [vmem:[#allocation2 + $0x270] sm:$0xff]
    %v147 = vld [vmem:[#allocation2 + $0x278] sm:$0xff]
    %v148 = vld [vmem:[#allocation2 + $0x280] sm:$0xff]
    %v149 = vld [vmem:[#allocation2 + $0x288] sm:$0xff]
    %v150 = vld [vmem:[#allocation2 + $0x290] sm:$0xff]
    %v151 = vld [vmem:[#allocation2 + $0x298] sm:$0xff]
    %v152 = vld [vmem:[#allocation2 + $0x2a0] sm:$0xff]
    %v153 = vld [vmem:[#allocation2 + $0x2a8] sm:$0xff]
    %v154 = vld [vmem:[#allocation2 + $0x2b0] sm:$0xff]
    %v155 = vld [vmem:[#allocation2 + $0x2b8] sm:$0xff]
    %v156 = vld [vmem:[#allocation2 + $0x2c0] sm:$0xff]
    %v157 = vld [vmem:[#allocation2 + $0x2c8] sm:$0xff]
    %v158 = vld [vmem:[#allocation2 + $0x2d0] sm:$0xff]
    %v159 = vld [vmem:[#allocation2 + $0x2d8] sm:$0xff]
    %v160 = vld [vmem:[#allocation2 + $0x2e0] sm:$0xff]
    %v161 = vld [vmem:[#allocation2 + $0x2e8] sm:$0xff]
    %v162 = vld [vmem:[#allocation2 + $0x2f0] sm:$0xff]
    %v163 = vld [vmem:[#allocation2 + $0x2f8] sm:$0xff]
    %v164 = vld [vmem:[#allocation2 + $0x300] sm:$0xff]
    %v165 = vld [vmem:[#allocation2 + $0x308] sm:$0xff]
    %v166 = vld [vmem:[#allocation2 + $0x310] sm:$0xff]
    %v167 = vld [vmem:[#allocation2 + $0x318] sm:$0xff]
    %v168 = vld [vmem:[#allocation2 + $0x320] sm:$0xff]
    %v169 = vld [vmem:[#allocation2 + $0x328] sm:$0xff]
    %v170 = vld [vmem:[#allocation2 + $0x330] sm:$0xff]
    %v171 = vld [vmem:[#allocation2 + $0x338] sm:$0xff]
    %v172 = vld [vmem:[#allocation2 + $0x340] sm:$0xff]
    %v173 = vld [vmem:[#allocation2 + $0x348] sm:$0xff]
    %v174 = vld [vmem:[#allocation2 + $0x350] sm:$0xff]
    %v175 = vld [vmem:[#allocation2 + $0x358] sm:$0xff]
    %v176 = vld [vmem:[#allocation2 + $0x360] sm:$0xff]
    %v177 = vld [vmem:[#allocation2 + $0x368] sm:$0xff]
    %v178 = vld [vmem:[#allocation2 + $0x370] sm:$0xff]
    %v179 = vld [vmem:[#allocation2 + $0x378] sm:$0xff]
    %v180 = vld [vmem:[#allocation2 + $0x380] sm:$0xff]
    %v181 = vld [vmem:[#allocation2 + $0x388] sm:$0xff]
    %v182 = vld [vmem:[#allocation2 + $0x390] sm:$0xff]
    %v183 = vld [vmem:[#allocation2 + $0x398] sm:$0xff]
    %v184 = vld [vmem:[#allocation2 + $0x3a0] sm:$0xff]
    %v185 = vld [vmem:[#allocation2 + $0x3a8] sm:$0xff]
    %v186 = vld [vmem:[#allocation2 + $0x3b0] sm:$0xff]
    %v187 = vld [vmem:[#allocation2 + $0x3b8] sm:$0xff]
    %v188 = vld [vmem:[#allocation2 + $0x3c0] sm:$0xff]
    %v189 = vld [vmem:[#allocation2 + $0x3c8] sm:$0xff]
    %v190 = vld [vmem:[#allocation2 + $0x3d0] sm:$0xff]
    %v191 = vld [vmem:[#allocation2 + $0x3d8] sm:$0xff]
    %v192 = vld [vmem:[#allocation2 + $0x3e0] sm:$0xff]
    %v193 = vld [vmem:[#allocation2 + $0x3e8] sm:$0xff]
    %v194 = vld [vmem:[#allocation2 + $0x3f0] sm:$0xff]
    %v195 = vld [vmem:[#allocation2 + $0x3f8] sm:$0xff]
    %v196 = vld [vmem:[#allocation2 + $0x400] sm:$0xff]
    %v197 = vld [vmem:[#allocation2 + $0x408] sm:$0xff]
    %v198 = vld [vmem:[#allocation2 + $0x410] sm:$0xff]
    %v199 = vld [vmem:[#allocation2 + $0x418] sm:$0xff]
    %v200 = vld [vmem:[#allocation2 + $0x420] sm:$0xff]
    %v201 = vld [vmem:[#allocation2 + $0x428] sm:$0xff]
    %v202 = vld [vmem:[#allocation2 + $0x430] sm:$0xff]
    %v203 = vld [vmem:[#allocation2 + $0x438] sm:$0xff]
    %v204 = vld [vmem:[#allocation2 + $0x440] sm:$0xff]
    %v205 = vld [vmem:[#allocation2 + $0x448] sm:$0xff]
    %v206 = vld [vmem:[#allocation2 + $0x450] sm:$0xff]
    %v207 = vld [vmem:[#allocation2 + $0x458] sm:$0xff]
    %v208 = vld [vmem:[#allocation2 + $0x460] sm:$0xff]
    %v209 = vld [vmem:[#allocation2 + $0x468] sm:$0xff]
    %v210 = vld [vmem:[#allocation2 + $0x470] sm:$0xff]
    %v211 = vld [vmem:[#allocation2 + $0x478] sm:$0xff]
    %v212 = vld [vmem:[#allocation2 + $0x480] sm:$0xff]
    %v213 = vld [vmem:[#allocation2 + $0x488] sm:$0xff]
    %v214 = vld [vmem:[#allocation2 + $0x490] sm:$0xff]
    %v215 = vld [vmem:[#allocation2 + $0x498] sm:$0xff]
    %v216 = vld [vmem:[#allocation2 + $0x4a0] sm:$0xff]
    %v217 = vld [vmem:[#allocation2 + $0x4a8] sm:$0xff]
    %v218 = vld [vmem:[#allocation2 + $0x4b0] sm:$0xff]
    %v219 = vld [vmem:[#allocation2 + $0x4b8] sm:$0xff]
    %v220 = vld [vmem:[#allocation2 + $0x4c0] sm:$0xff]
    %v221 = vld [vmem:[#allocation2 + $0x4c8] sm:$0xff]
    %v222 = vld [vmem:[#allocation2 + $0x4d0] sm:$0xff]
    %v223 = vld [vmem:[#allocation2 + $0x4d8] sm:$0xff]
    %v224 = vld [vmem:[#allocation2 + $0x4e0] sm:$0xff]
    %v225 = vld [vmem:[#allocation2 + $0x4e8] sm:$0xff]
    %v226 = vld [vmem:[#allocation2 + $0x4f0] sm:$0xff]
    %v227 = vld [vmem:[#allocation2 + $0x4f8] sm:$0xff]
    %v228 = vld [vmem:[#allocation2 + $0x500] sm:$0xff]
    %v229 = vld [vmem:[#allocation2 + $0x508] sm:$0xff]
    %v230 = vld [vmem:[#allocation2 + $0x510] sm:$0xff]
    %v231 = vld [vmem:[#allocation2 + $0x518] sm:$0xff]
    %v232 = vld [vmem:[#allocation2 + $0x520] sm:$0xff]
    %v233 = vld [vmem:[#allocation2 + $0x528] sm:$0xff]
    %v234 = vld [vmem:[#allocation2 + $0x530] sm:$0xff]
    %v235 = vld [vmem:[#allocation2 + $0x538] sm:$0xff]
    %v236 = vld [vmem:[#allocation2 + $0x540] sm:$0xff]
    %v237 = vld [vmem:[#allocation2 + $0x548] sm:$0xff]
    %v238 = vld [vmem:[#allocation2 + $0x550] sm:$0xff]
    %v239 = vld [vmem:[#allocation2 + $0x558] sm:$0xff]
    %v240 = vld [vmem:[#allocation2 + $0x560] sm:$0xff]
    %v241 = vld [vmem:[#allocation2 + $0x568] sm:$0xff]
    %v242 = vld [vmem:[#allocation2 + $0x570] sm:$0xff]
    %v243 = vld [vmem:[#allocation2 + $0x578] sm:$0xff]
    %v244 = vld [vmem:[#allocation2 + $0x580] sm:$0xff]
    %v245 = vld [vmem:[#allocation2 + $0x588] sm:$0xff]
    %v246 = vld [vmem:[#allocation2 + $0x590] sm:$0xff]
    %v247 = vld [vmem:[#allocation2 + $0x598] sm:$0xff]
    %v248 = vld [vmem:[#allocation2 + $0x5a0] sm:$0xff]
    %v249 = vld [vmem:[#allocation2 + $0x5a8] sm:$0xff]
    %v250 = vld [vmem:[#allocation2 + $0x5b0] sm:$0xff]
    %v251 = vld [vmem:[#allocation2 + $0x5b8] sm:$0xff]
    %v252 = vld [vmem:[#allocation2 + $0x5c0] sm:$0xff]
    %v253 = vld [vmem:[#allocation2 + $0x5c8] sm:$0xff]
    %v254 = vld [vmem:[#allocation2 + $0x5d0] sm:$0xff]
    %v255 = vld [vmem:[#allocation2 + $0x5d8] sm:$0xff]
    %v256 = vld [vmem:[#allocation2 + $0x5e0] sm:$0xff]
    %v257 = vld [vmem:[#allocation2 + $0x5e8] sm:$0xff]
    %v258 = vld [vmem:[#allocation2 + $0x5f0] sm:$0xff]
    %v259 = vld [vmem:[#allocation2 + $0x5f8] sm:$0xff]
    %v260 = vld [vmem:[#allocation2 + $0x600] sm:$0xff]
    %v261 = vld [vmem:[#allocation2 + $0x608] sm:$0xff]
    %v262 = vld [vmem:[#allocation2 + $0x610] sm:$0xff]
    %v263 = vld [vmem:[#allocation2 + $0x618] sm:$0xff]
    %v264 = vld [vmem:[%s2] sm:$0xf]
    %v266 = vlaneseq
    %v267 = vshrl.u32 %v266, 7
    %v268 = vsub.s32 0, %v267
    %v269 = vrot.slane %v264, %v268
    %v270 = vlaneseq
    %v271 = vshrl.u32 %v270, 7
    %v272 = vsub.s32 1, %v271
    %v273 = vrot.slane %v264, %v272
    %v274 = vlaneseq
    %v275 = vshrl.u32 %v274, 7
    %v276 = vsub.s32 2, %v275
    %v277 = vrot.slane %v264, %v276
    %v278 = vlaneseq
    %v279 = vshrl.u32 %v278, 7
    %v280 = vsub.s32 3, %v279
    %v281 = vrot.slane %v264, %v280
    %v482 = vunpack.c.l.b16 %v68
    %v483 = vunpack.c.h.b16 %v68
    %v484 = vunpack.c.l.b16 %v69
    %v485 = vunpack.c.h.b16 %v69
    %v486 = vunpack.c.l.b16 %v70
    %v487 = vunpack.c.h.b16 %v70
    %v488 = vunpack.c.l.b16 %v71
    %v489 = vunpack.c.h.b16 %v71
    %v490 = vunpack.c.l.b16 %v72
    %v491 = vunpack.c.h.b16 %v72
    %v492 = vunpack.c.l.b16 %v73
    %v493 = vunpack.c.h.b16 %v73
    %v494 = vunpack.c.l.b16 %v74
    %v495 = vunpack.c.h.b16 %v74
    %v496 = vunpack.c.l.b16 %v75
    %v497 = vunpack.c.h.b16 %v75
    %v498 = vunpack.c.l.b16 %v76
    %v499 = vunpack.c.h.b16 %v76
    %v500 = vunpack.c.l.b16 %v77
    %v501 = vunpack.c.h.b16 %v77
    %v502 = vunpack.c.l.b16 %v78
    %v503 = vunpack.c.h.b16 %v78
    %v504 = vunpack.c.l.b16 %v79
    %v505 = vunpack.c.h.b16 %v79
    %v506 = vunpack.c.l.b16 %v80
    %v507 = vunpack.c.h.b16 %v80
    %v508 = vunpack.c.l.b16 %v81
    %v509 = vunpack.c.h.b16 %v81
    %v510 = vunpack.c.l.b16 %v82
    %v511 = vunpack.c.h.b16 %v82
    %v512 = vunpack.c.l.b16 %v83
    %v513 = vunpack.c.h.b16 %v83
    %v514 = vunpack.c.l.b16 %v84
    %v515 = vunpack.c.h.b16 %v84
    %v516 = vunpack.c.l.b16 %v85
    %v517 = vunpack.c.h.b16 %v85
    %v518 = vunpack.c.l.b16 %v86
    %v519 = vunpack.c.h.b16 %v86
    %v520 = vunpack.c.l.b16 %v87
    %v521 = vunpack.c.h.b16 %v87
    %v522 = vunpack.c.l.b16 %v88
    %v523 = vunpack.c.h.b16 %v88
    %v524 = vunpack.c.l.b16 %v89
    %v525 = vunpack.c.h.b16 %v89
    %v526 = vunpack.c.l.b16 %v90
    %v527 = vunpack.c.h.b16 %v90
    %v528 = vunpack.c.l.b16 %v91
    %v529 = vunpack.c.h.b16 %v91
    %v530 = vunpack.c.l.b16 %v92
    %v531 = vunpack.c.h.b16 %v92
    %v532 = vunpack.c.l.b16 %v93
    %v533 = vunpack.c.h.b16 %v93
    %v534 = vunpack.c.l.b16 %v94
    %v535 = vunpack.c.h.b16 %v94
    %v536 = vunpack.c.l.b16 %v95
    %v537 = vunpack.c.h.b16 %v95
    %v538 = vunpack.c.l.b16 %v96
    %v539 = vunpack.c.h.b16 %v96
    %v540 = vunpack.c.l.b16 %v97
    %v541 = vunpack.c.h.b16 %v97
    %v542 = vunpack.c.l.b16 %v98
    %v543 = vunpack.c.h.b16 %v98
    %v544 = vunpack.c.l.b16 %v99
    %v545 = vunpack.c.h.b16 %v99
    %v546 = vunpack.c.l.b16 %v100
    %v547 = vunpack.c.h.b16 %v100
    %v548 = vunpack.c.l.b16 %v101
    %v549 = vunpack.c.h.b16 %v101
    %v550 = vunpack.c.l.b16 %v102
    %v551 = vunpack.c.h.b16 %v102
    %v552 = vunpack.c.l.b16 %v103
    %v553 = vunpack.c.h.b16 %v103
    %v554 = vunpack.c.l.b16 %v104
    %v555 = vunpack.c.h.b16 %v104
    %v556 = vunpack.c.l.b16 %v105
    %v557 = vunpack.c.h.b16 %v105
    %v558 = vunpack.c.l.b16 %v106
    %v559 = vunpack.c.h.b16 %v106
    %v560 = vunpack.c.l.b16 %v107
    %v561 = vunpack.c.h.b16 %v107
    %v562 = vunpack.c.l.b16 %v108
    %v563 = vunpack.c.h.b16 %v108
    %v564 = vunpack.c.l.b16 %v109
    %v565 = vunpack.c.h.b16 %v109
    %v566 = vunpack.c.l.b16 %v110
    %v567 = vunpack.c.h.b16 %v110
    %v568 = vunpack.c.l.b16 %v111
    %v569 = vunpack.c.h.b16 %v111
    %v570 = vunpack.c.l.b16 %v112
    %v571 = vunpack.c.h.b16 %v112
    %v572 = vunpack.c.l.b16 %v113
    %v573 = vunpack.c.h.b16 %v113
    %v574 = vunpack.c.l.b16 %v114
    %v575 = vunpack.c.h.b16 %v114
    %v576 = vunpack.c.l.b16 %v115
    %v577 = vunpack.c.h.b16 %v115
    %v578 = vunpack.c.l.b16 %v116
    %v579 = vunpack.c.h.b16 %v116
    %v580 = vunpack.c.l.b16 %v117
    %v581 = vunpack.c.h.b16 %v117
    %v582 = vunpack.c.l.b16 %v118
    %v583 = vunpack.c.h.b16 %v118
    %v584 = vunpack.c.l.b16 %v119
    %v585 = vunpack.c.h.b16 %v119
    %v586 = vunpack.c.l.b16 %v120
    %v587 = vunpack.c.h.b16 %v120
    %v588 = vunpack.c.l.b16 %v121
    %v589 = vunpack.c.h.b16 %v121
    %v590 = vunpack.c.l.b16 %v122
    %v591 = vunpack.c.h.b16 %v122
    %v592 = vunpack.c.l.b16 %v123
    %v593 = vunpack.c.h.b16 %v123
    %v594 = vunpack.c.l.b16 %v124
    %v595 = vunpack.c.h.b16 %v124
    %v596 = vunpack.c.l.b16 %v125
    %v597 = vunpack.c.h.b16 %v125
    %v598 = vunpack.c.l.b16 %v126
    %v599 = vunpack.c.h.b16 %v126
    %v600 = vunpack.c.l.b16 %v127
    %v601 = vunpack.c.h.b16 %v127
    %v602 = vunpack.c.l.b16 %v128
    %v603 = vunpack.c.h.b16 %v128
    %v604 = vunpack.c.l.b16 %v129
    %v605 = vunpack.c.h.b16 %v129
    %v606 = vunpack.c.l.b16 %v130
    %v607 = vunpack.c.h.b16 %v130
    %v608 = vunpack.c.l.b16 %v131
    %v609 = vunpack.c.h.b16 %v131
    %v610 = vunpack.c.l.b16 %v132
    %v611 = vunpack.c.h.b16 %v132
    %v612 = vunpack.c.l.b16 %v133
    %v613 = vunpack.c.h.b16 %v133
    %v614 = vunpack.c.l.b16 %v134
    %v615 = vunpack.c.h.b16 %v134
    %v616 = vunpack.c.l.b16 %v135
    %v617 = vunpack.c.h.b16 %v135
    %v618 = vunpack.c.l.b16 %v136
    %v619 = vunpack.c.h.b16 %v136
    %v620 = vunpack.c.l.b16 %v137
    %v621 = vunpack.c.h.b16 %v137
    %v622 = vunpack.c.l.b16 %v138
    %v623 = vunpack.c.h.b16 %v138
    %v624 = vunpack.c.l.b16 %v139
    %v625 = vunpack.c.h.b16 %v139
    %v626 = vunpack.c.l.b16 %v140
    %v627 = vunpack.c.h.b16 %v140
    %v628 = vunpack.c.l.b16 %v141
    %v629 = vunpack.c.h.b16 %v141
    %v630 = vunpack.c.l.b16 %v142
    %v631 = vunpack.c.h.b16 %v142
    %v632 = vunpack.c.l.b16 %v143
    %v633 = vunpack.c.h.b16 %v143
    %v634 = vunpack.c.l.b16 %v144
    %v635 = vunpack.c.h.b16 %v144
    %v636 = vunpack.c.l.b16 %v145
    %v637 = vunpack.c.h.b16 %v145
    %v638 = vunpack.c.l.b16 %v146
    %v639 = vunpack.c.h.b16 %v146
    %v640 = vunpack.c.l.b16 %v147
    %v641 = vunpack.c.h.b16 %v147
    %v642 = vunpack.c.l.b16 %v148
    %v643 = vunpack.c.h.b16 %v148
    %v644 = vunpack.c.l.b16 %v149
    %v645 = vunpack.c.h.b16 %v149
    %v646 = vunpack.c.l.b16 %v150
    %v647 = vunpack.c.h.b16 %v150
    %v648 = vunpack.c.l.b16 %v151
    %v649 = vunpack.c.h.b16 %v151
    %v650 = vunpack.c.l.b16 %v152
    %v651 = vunpack.c.h.b16 %v152
    %v652 = vunpack.c.l.b16 %v153
    %v653 = vunpack.c.h.b16 %v153
    %v654 = vunpack.c.l.b16 %v154
    %v655 = vunpack.c.h.b16 %v154
    %v656 = vunpack.c.l.b16 %v155
    %v657 = vunpack.c.h.b16 %v155
    %v658 = vunpack.c.l.b16 %v156
    %v659 = vunpack.c.h.b16 %v156
    %v660 = vunpack.c.l.b16 %v157
    %v661 = vunpack.c.h.b16 %v157
    %v662 = vunpack.c.l.b16 %v158
    %v663 = vunpack.c.h.b16 %v158
    %v664 = vunpack.c.l.b16 %v159
    %v665 = vunpack.c.h.b16 %v159
    %v666 = vunpack.c.l.b16 %v160
    %v667 = vunpack.c.h.b16 %v160
    %v668 = vunpack.c.l.b16 %v161
    %v669 = vunpack.c.h.b16 %v161
    %v670 = vunpack.c.l.b16 %v162
    %v671 = vunpack.c.h.b16 %v162
    %v672 = vunpack.c.l.b16 %v163
    %v673 = vunpack.c.h.b16 %v163
    %v674 = vunpack.c.l.b16 %v164
    %v675 = vunpack.c.h.b16 %v164
    %v676 = vunpack.c.l.b16 %v165
    %v677 = vunpack.c.h.b16 %v165
    %v678 = vunpack.c.l.b16 %v166
    %v679 = vunpack.c.h.b16 %v166
    %v680 = vunpack.c.l.b16 %v167
    %v681 = vunpack.c.h.b16 %v167
    %v682 = vunpack.c.l.b16 %v168
    %v683 = vunpack.c.h.b16 %v168
    %v684 = vunpack.c.l.b16 %v169
    %v685 = vunpack.c.h.b16 %v169
    %v686 = vunpack.c.l.b16 %v170
    %v687 = vunpack.c.h.b16 %v170
    %v688 = vunpack.c.l.b16 %v171
    %v689 = vunpack.c.h.b16 %v171
    %v690 = vunpack.c.l.b16 %v172
    %v691 = vunpack.c.h.b16 %v172
    %v692 = vunpack.c.l.b16 %v173
    %v693 = vunpack.c.h.b16 %v173
    %v694 = vunpack.c.l.b16 %v174
    %v695 = vunpack.c.h.b16 %v174
    %v696 = vunpack.c.l.b16 %v175
    %v697 = vunpack.c.h.b16 %v175
    %v698 = vunpack.c.l.b16 %v176
    %v699 = vunpack.c.h.b16 %v176
    %v700 = vunpack.c.l.b16 %v177
    %v701 = vunpack.c.h.b16 %v177
    %v702 = vunpack.c.l.b16 %v178
    %v703 = vunpack.c.h.b16 %v178
    %v704 = vunpack.c.l.b16 %v179
    %v705 = vunpack.c.h.b16 %v179
    %v706 = vunpack.c.l.b16 %v180
    %v707 = vunpack.c.h.b16 %v180
    %v708 = vunpack.c.l.b16 %v181
    %v709 = vunpack.c.h.b16 %v181
    %v710 = vunpack.c.l.b16 %v182
    %v711 = vunpack.c.h.b16 %v182
    %v712 = vunpack.c.l.b16 %v183
    %v713 = vunpack.c.h.b16 %v183
    %v714 = vunpack.c.l.b16 %v184
    %v715 = vunpack.c.h.b16 %v184
    %v716 = vunpack.c.l.b16 %v185
    %v717 = vunpack.c.h.b16 %v185
    %v718 = vunpack.c.l.b16 %v186
    %v719 = vunpack.c.h.b16 %v186
    %v720 = vunpack.c.l.b16 %v187
    %v721 = vunpack.c.h.b16 %v187
    %v722 = vunpack.c.l.b16 %v188
    %v723 = vunpack.c.h.b16 %v188
    %v724 = vunpack.c.l.b16 %v189
    %v725 = vunpack.c.h.b16 %v189
    %v726 = vunpack.c.l.b16 %v190
    %v727 = vunpack.c.h.b16 %v190
    %v728 = vunpack.c.l.b16 %v191
    %v729 = vunpack.c.h.b16 %v191
    %v730 = vunpack.c.l.b16 %v192
    %v731 = vunpack.c.h.b16 %v192
    %v732 = vunpack.c.l.b16 %v193
    %v733 = vunpack.c.h.b16 %v193
    %v734 = vunpack.c.l.b16 %v194
    %v735 = vunpack.c.h.b16 %v194
    %v736 = vunpack.c.l.b16 %v195
    %v737 = vunpack.c.h.b16 %v195
    %v738 = vunpack.c.l.b16 %v196
    %v739 = vunpack.c.h.b16 %v196
    %v740 = vunpack.c.l.b16 %v197
    %v741 = vunpack.c.h.b16 %v197
    %v742 = vunpack.c.l.b16 %v198
    %v743 = vunpack.c.h.b16 %v198
    %v744 = vunpack.c.l.b16 %v199
    %v745 = vunpack.c.h.b16 %v199
    %v746 = vunpack.c.l.b16 %v200
    %v747 = vunpack.c.h.b16 %v200
    %v748 = vunpack.c.l.b16 %v201
    %v749 = vunpack.c.h.b16 %v201
    %v750 = vunpack.c.l.b16 %v202
    %v751 = vunpack.c.h.b16 %v202
    %v752 = vunpack.c.l.b16 %v203
    %v753 = vunpack.c.h.b16 %v203
    %v754 = vunpack.c.l.b16 %v204
    %v755 = vunpack.c.h.b16 %v204
    %v756 = vunpack.c.l.b16 %v205
    %v757 = vunpack.c.h.b16 %v205
    %v758 = vunpack.c.l.b16 %v206
    %v759 = vunpack.c.h.b16 %v206
    %v760 = vunpack.c.l.b16 %v207
    %v761 = vunpack.c.h.b16 %v207
    %v762 = vunpack.c.l.b16 %v208
    %v763 = vunpack.c.h.b16 %v208
    %v764 = vunpack.c.l.b16 %v209
    %v765 = vunpack.c.h.b16 %v209
    %v766 = vunpack.c.l.b16 %v210
    %v767 = vunpack.c.h.b16 %v210
    %v768 = vunpack.c.l.b16 %v211
    %v769 = vunpack.c.h.b16 %v211
    %v770 = vunpack.c.l.b16 %v212
    %v771 = vunpack.c.h.b16 %v212
    %v772 = vunpack.c.l.b16 %v213
    %v773 = vunpack.c.h.b16 %v213
    %v774 = vunpack.c.l.b16 %v214
    %v775 = vunpack.c.h.b16 %v214
    %v776 = vunpack.c.l.b16 %v215
    %v777 = vunpack.c.h.b16 %v215
    %v778 = vunpack.c.l.b16 %v216
    %v779 = vunpack.c.h.b16 %v216
    %v780 = vunpack.c.l.b16 %v217
    %v781 = vunpack.c.h.b16 %v217
    %v782 = vunpack.c.l.b16 %v218
    %v783 = vunpack.c.h.b16 %v218
    %v784 = vunpack.c.l.b16 %v219
    %v785 = vunpack.c.h.b16 %v219
    %v786 = vunpack.c.l.b16 %v220
    %v787 = vunpack.c.h.b16 %v220
    %v788 = vunpack.c.l.b16 %v221
    %v789 = vunpack.c.h.b16 %v221
    %v790 = vunpack.c.l.b16 %v222
    %v791 = vunpack.c.h.b16 %v222
    %v792 = vunpack.c.l.b16 %v223
    %v793 = vunpack.c.h.b16 %v223
    %v794 = vunpack.c.l.b16 %v224
    %v795 = vunpack.c.h.b16 %v224
    %v796 = vunpack.c.l.b16 %v225
    %v797 = vunpack.c.h.b16 %v225
    %v798 = vunpack.c.l.b16 %v226
    %v799 = vunpack.c.h.b16 %v226
    %v800 = vunpack.c.l.b16 %v227
    %v801 = vunpack.c.h.b16 %v227
    %v802 = vunpack.c.l.b16 %v228
    %v803 = vunpack.c.h.b16 %v228
    %v804 = vunpack.c.l.b16 %v229
    %v805 = vunpack.c.h.b16 %v229
    %v806 = vunpack.c.l.b16 %v230
    %v807 = vunpack.c.h.b16 %v230
    %v808 = vunpack.c.l.b16 %v231
    %v809 = vunpack.c.h.b16 %v231
    %v810 = vunpack.c.l.b16 %v232
    %v811 = vunpack.c.h.b16 %v232
    %v812 = vunpack.c.l.b16 %v233
    %v813 = vunpack.c.h.b16 %v233
    %v814 = vunpack.c.l.b16 %v234
    %v815 = vunpack.c.h.b16 %v234
    %v816 = vunpack.c.l.b16 %v235
    %v817 = vunpack.c.h.b16 %v235
    %v818 = vunpack.c.l.b16 %v236
    %v819 = vunpack.c.h.b16 %v236
    %v820 = vunpack.c.l.b16 %v237
    %v821 = vunpack.c.h.b16 %v237
    %v822 = vunpack.c.l.b16 %v238
    %v823 = vunpack.c.h.b16 %v238
    %v824 = vunpack.c.l.b16 %v239
    %v825 = vunpack.c.h.b16 %v239
    %v826 = vunpack.c.l.b16 %v240
    %v827 = vunpack.c.h.b16 %v240
    %v828 = vunpack.c.l.b16 %v241
    %v829 = vunpack.c.h.b16 %v241
    %v830 = vunpack.c.l.b16 %v242
    %v831 = vunpack.c.h.b16 %v242
    %v832 = vunpack.c.l.b16 %v243
    %v833 = vunpack.c.h.b16 %v243
    %v834 = vunpack.c.l.b16 %v244
    %v835 = vunpack.c.h.b16 %v244
    %v836 = vunpack.c.l.b16 %v245
    %v837 = vunpack.c.h.b16 %v245
    %v838 = vunpack.c.l.b16 %v246
    %v839 = vunpack.c.h.b16 %v246
    %v840 = vunpack.c.l.b16 %v247
    %v841 = vunpack.c.h.b16 %v247
    %v842 = vunpack.c.l.b16 %v248
    %v843 = vunpack.c.h.b16 %v248
    %v844 = vunpack.c.l.b16 %v249
    %v845 = vunpack.c.h.b16 %v249
    %v846 = vunpack.c.l.b16 %v250
    %v847 = vunpack.c.h.b16 %v250
    %v848 = vunpack.c.l.b16 %v251
    %v849 = vunpack.c.h.b16 %v251
    %v850 = vunpack.c.l.b16 %v252
    %v851 = vunpack.c.h.b16 %v252
    %v852 = vunpack.c.l.b16 %v253
    %v853 = vunpack.c.h.b16 %v253
    %v854 = vunpack.c.l.b16 %v254
    %v855 = vunpack.c.h.b16 %v254
    %v856 = vunpack.c.l.b16 %v255
    %v857 = vunpack.c.h.b16 %v255
    %v858 = vunpack.c.l.b16 %v256
    %v859 = vunpack.c.h.b16 %v256
    %v860 = vunpack.c.l.b16 %v257
    %v861 = vunpack.c.h.b16 %v257
    %v862 = vunpack.c.l.b16 %v258
    %v863 = vunpack.c.h.b16 %v258
    %v864 = vunpack.c.l.b16 %v259
    %v865 = vunpack.c.h.b16 %v259
    %v866 = vunpack.c.l.b16 %v260
    %v867 = vunpack.c.h.b16 %v260
    %v868 = vunpack.c.l.b16 %v261
    %v869 = vunpack.c.h.b16 %v261
    %v870 = vunpack.c.l.b16 %v262
    %v871 = vunpack.c.h.b16 %v262
    %v872 = vunpack.c.l.b16 %v263
    %v873 = vunpack.c.h.b16 %v263
    %v874 = vpack.c.b16 %v486, %v482
    %v875 = vpack.c.b16 %v487, %v483
    %v876 = vpack.c.b16 %v488, %v484
    %v877 = vpack.c.b16 %v489, %v485
    %v878 = vpack.c.b16 %v494, %v490
    %v879 = vpack.c.b16 %v495, %v491
    %v880 = vpack.c.b16 %v496, %v492
    %v881 = vpack.c.b16 %v497, %v493
    %v882 = vpack.c.b16 %v502, %v498
    %v883 = vpack.c.b16 %v503, %v499
    %v884 = vpack.c.b16 %v504, %v500
    %v885 = vpack.c.b16 %v505, %v501
    %v886 = vpack.c.b16 %v510, %v506
    %v887 = vpack.c.b16 %v511, %v507
    %v888 = vpack.c.b16 %v512, %v508
    %v889 = vpack.c.b16 %v513, %v509
    %v890 = vpack.c.b16 %v518, %v514
    %v891 = vpack.c.b16 %v519, %v515
    %v892 = vpack.c.b16 %v520, %v516
    %v893 = vpack.c.b16 %v521, %v517
    %v894 = vpack.c.b16 %v526, %v522
    %v895 = vpack.c.b16 %v527, %v523
    %v896 = vpack.c.b16 %v528, %v524
    %v897 = vpack.c.b16 %v529, %v525
    %v898 = vpack.c.b16 %v534, %v530
    %v899 = vpack.c.b16 %v535, %v531
    %v900 = vpack.c.b16 %v536, %v532
    %v901 = vpack.c.b16 %v537, %v533
    %v902 = vpack.c.b16 %v542, %v538
    %v903 = vpack.c.b16 %v543, %v539
    %v904 = vpack.c.b16 %v544, %v540
    %v905 = vpack.c.b16 %v545, %v541
    %v906 = vpack.c.b16 %v550, %v546
    %v907 = vpack.c.b16 %v551, %v547
    %v908 = vpack.c.b16 %v552, %v548
    %v909 = vpack.c.b16 %v553, %v549
    %v910 = vpack.c.b16 %v558, %v554
    %v911 = vpack.c.b16 %v559, %v555
    %v912 = vpack.c.b16 %v560, %v556
    %v913 = vpack.c.b16 %v561, %v557
    %v914 = vpack.c.b16 %v566, %v562
    %v915 = vpack.c.b16 %v567, %v563
    %v916 = vpack.c.b16 %v568, %v564
    %v917 = vpack.c.b16 %v569, %v565
    %v918 = vpack.c.b16 %v574, %v570
    %v919 = vpack.c.b16 %v575, %v571
    %v920 = vpack.c.b16 %v576, %v572
    %v921 = vpack.c.b16 %v577, %v573
    %v922 = vpack.c.b16 %v582, %v578
    %v923 = vpack.c.b16 %v583, %v579
    %v924 = vpack.c.b16 %v584, %v580
    %v925 = vpack.c.b16 %v585, %v581
    %v926 = vpack.c.b16 %v590, %v586
    %v927 = vpack.c.b16 %v591, %v587
    %v928 = vpack.c.b16 %v592, %v588
    %v929 = vpack.c.b16 %v593, %v589
    %v930 = vpack.c.b16 %v598, %v594
    %v931 = vpack.c.b16 %v599, %v595
    %v932 = vpack.c.b16 %v600, %v596
    %v933 = vpack.c.b16 %v601, %v597
    %v934 = vpack.c.b16 %v606, %v602
    %v935 = vpack.c.b16 %v607, %v603
    %v936 = vpack.c.b16 %v608, %v604
    %v937 = vpack.c.b16 %v609, %v605
    %v938 = vpack.c.b16 %v614, %v610
    %v939 = vpack.c.b16 %v615, %v611
    %v940 = vpack.c.b16 %v616, %v612
    %v941 = vpack.c.b16 %v617, %v613
    %v942 = vpack.c.b16 %v622, %v618
    %v943 = vpack.c.b16 %v623, %v619
    %v944 = vpack.c.b16 %v624, %v620
    %v945 = vpack.c.b16 %v625, %v621
    %v946 = vpack.c.b16 %v630, %v626
    %v947 = vpack.c.b16 %v631, %v627
    %v948 = vpack.c.b16 %v632, %v628
    %v949 = vpack.c.b16 %v633, %v629
    %v950 = vpack.c.b16 %v638, %v634
    %v951 = vpack.c.b16 %v639, %v635
    %v952 = vpack.c.b16 %v640, %v636
    %v953 = vpack.c.b16 %v641, %v637
    %v954 = vpack.c.b16 %v646, %v642
    %v955 = vpack.c.b16 %v647, %v643
    %v956 = vpack.c.b16 %v648, %v644
    %v957 = vpack.c.b16 %v649, %v645
    %v958 = vpack.c.b16 %v654, %v650
    %v959 = vpack.c.b16 %v655, %v651
    %v960 = vpack.c.b16 %v656, %v652
    %v961 = vpack.c.b16 %v657, %v653
    %v962 = vpack.c.b16 %v662, %v658
    %v963 = vpack.c.b16 %v663, %v659
    %v964 = vpack.c.b16 %v664, %v660
    %v965 = vpack.c.b16 %v665, %v661
    %v966 = vpack.c.b16 %v670, %v666
    %v967 = vpack.c.b16 %v671, %v667
    %v968 = vpack.c.b16 %v672, %v668
    %v969 = vpack.c.b16 %v673, %v669
    %v970 = vpack.c.b16 %v678, %v674
    %v971 = vpack.c.b16 %v679, %v675
    %v972 = vpack.c.b16 %v680, %v676
    %v973 = vpack.c.b16 %v681, %v677
    %v974 = vpack.c.b16 %v686, %v682
    %v975 = vpack.c.b16 %v687, %v683
    %v976 = vpack.c.b16 %v688, %v684
    %v977 = vpack.c.b16 %v689, %v685
    %v978 = vpack.c.b16 %v694, %v690
    %v979 = vpack.c.b16 %v695, %v691
    %v980 = vpack.c.b16 %v696, %v692
    %v981 = vpack.c.b16 %v697, %v693
    %v982 = vpack.c.b16 %v702, %v698
    %v983 = vpack.c.b16 %v703, %v699
    %v984 = vpack.c.b16 %v704, %v700
    %v985 = vpack.c.b16 %v705, %v701
    %v986 = vpack.c.b16 %v710, %v706
    %v987 = vpack.c.b16 %v711, %v707
    %v988 = vpack.c.b16 %v712, %v708
    %v989 = vpack.c.b16 %v713, %v709
    %v990 = vpack.c.b16 %v718, %v714
    %v991 = vpack.c.b16 %v719, %v715
    %v992 = vpack.c.b16 %v720, %v716
    %v993 = vpack.c.b16 %v721, %v717
    %v994 = vpack.c.b16 %v726, %v722
    %v995 = vpack.c.b16 %v727, %v723
    %v996 = vpack.c.b16 %v728, %v724
    %v997 = vpack.c.b16 %v729, %v725
    %v998 = vpack.c.b16 %v734, %v730
    %v999 = vpack.c.b16 %v735, %v731
    %v1000 = vpack.c.b16 %v736, %v732
    %v1001 = vpack.c.b16 %v737, %v733
    %v1002 = vpack.c.b16 %v742, %v738
    %v1003 = vpack.c.b16 %v743, %v739
    %v1004 = vpack.c.b16 %v744, %v740
    %v1005 = vpack.c.b16 %v745, %v741
    %v1006 = vpack.c.b16 %v750, %v746
    %v1007 = vpack.c.b16 %v751, %v747
    %v1008 = vpack.c.b16 %v752, %v748
    %v1009 = vpack.c.b16 %v753, %v749
    %v1010 = vpack.c.b16 %v758, %v754
    %v1011 = vpack.c.b16 %v759, %v755
    %v1012 = vpack.c.b16 %v760, %v756
    %v1013 = vpack.c.b16 %v761, %v757
    %v1014 = vpack.c.b16 %v766, %v762
    %v1015 = vpack.c.b16 %v767, %v763
    %v1016 = vpack.c.b16 %v768, %v764
    %v1017 = vpack.c.b16 %v769, %v765
    %v1018 = vpack.c.b16 %v774, %v770
    %v1019 = vpack.c.b16 %v775, %v771
    %v1020 = vpack.c.b16 %v776, %v772
    %v1021 = vpack.c.b16 %v777, %v773
    %v1022 = vpack.c.b16 %v782, %v778
    %v1023 = vpack.c.b16 %v783, %v779
    %v1024 = vpack.c.b16 %v784, %v780
    %v1025 = vpack.c.b16 %v785, %v781
    %v1026 = vpack.c.b16 %v790, %v786
    %v1027 = vpack.c.b16 %v791, %v787
    %v1028 = vpack.c.b16 %v792, %v788
    %v1029 = vpack.c.b16 %v793, %v789
    %v1030 = vpack.c.b16 %v798, %v794
    %v1031 = vpack.c.b16 %v799, %v795
    %v1032 = vpack.c.b16 %v800, %v796
    %v1033 = vpack.c.b16 %v801, %v797
    %v1034 = vpack.c.b16 %v806, %v802
    %v1035 = vpack.c.b16 %v807, %v803
    %v1036 = vpack.c.b16 %v808, %v804
    %v1037 = vpack.c.b16 %v809, %v805
    %v1038 = vpack.c.b16 %v814, %v810
    %v1039 = vpack.c.b16 %v815, %v811
    %v1040 = vpack.c.b16 %v816, %v812
    %v1041 = vpack.c.b16 %v817, %v813
    %v1042 = vpack.c.b16 %v822, %v818
    %v1043 = vpack.c.b16 %v823, %v819
    %v1044 = vpack.c.b16 %v824, %v820
    %v1045 = vpack.c.b16 %v825, %v821
    %v1046 = vpack.c.b16 %v830, %v826
    %v1047 = vpack.c.b16 %v831, %v827
    %v1048 = vpack.c.b16 %v832, %v828
    %v1049 = vpack.c.b16 %v833, %v829
    %v1050 = vpack.c.b16 %v838, %v834
    %v1051 = vpack.c.b16 %v839, %v835
    %v1052 = vpack.c.b16 %v840, %v836
    %v1053 = vpack.c.b16 %v841, %v837
    %v1054 = vpack.c.b16 %v846, %v842
    %v1055 = vpack.c.b16 %v847, %v843
    %v1056 = vpack.c.b16 %v848, %v844
    %v1057 = vpack.c.b16 %v849, %v845
    %v1058 = vpack.c.b16 %v854, %v850
    %v1059 = vpack.c.b16 %v855, %v851
    %v1060 = vpack.c.b16 %v856, %v852
    %v1061 = vpack.c.b16 %v857, %v853
    %v1062 = vpack.c.b16 %v862, %v858
    %v1063 = vpack.c.b16 %v863, %v859
    %v1064 = vpack.c.b16 %v864, %v860
    %v1065 = vpack.c.b16 %v865, %v861
    %v1066 = vpack.c.b16 %v870, %v866
    %v1067 = vpack.c.b16 %v871, %v867
    %v1068 = vpack.c.b16 %v872, %v868
    %v1069 = vpack.c.b16 %v873, %v869
    %vm1266 = vcmask 130048
    %v1268 = vsel %vm1266, %v67, 0
    %1270 = vmatprep.subr.bf16.mxu0 %v875
    %1271 = vmatpush1.bf16.msra.mxu0 %v874
    %1272 = vmatprep.subr.bf16.mxu0 %v879
    %1273 = vmatpush1.bf16.msra.mxu0 %v878
    %1274 = vmatprep.subr.bf16.mxu0 %v883
    %1275 = vmatpush1.bf16.msra.mxu0 %v882
    %1276 = vmatprep.subr.bf16.mxu0 %v887
    %1277 = vmatpush1.bf16.msra.mxu0 %v886
    %1278 = vmatprep.subr.bf16.mxu0 %v891
    %1279 = vmatpush1.bf16.msra.mxu0 %v890
    %1280 = vmatprep.subr.bf16.mxu0 %v895
    %1281 = vmatpush1.bf16.msra.mxu0 %v894
    %1282 = vmatprep.subr.bf16.mxu0 %v899
    %1283 = vmatpush1.bf16.msra.mxu0 %v898
    %1284 = vmatprep.subr.bf16.mxu0 %v903
    %1285 = vmatpush1.bf16.msra.mxu0 %v902
    %1286 = vmatprep.subr.bf16.mxu0 %v907
    %1287 = vmatpush1.bf16.msra.mxu0 %v906
    %1288 = vmatprep.subr.bf16.mxu0 %v911
    %1289 = vmatpush1.bf16.msra.mxu0 %v910
    %1290 = vmatprep.subr.bf16.mxu0 %v915
    %1291 = vmatpush1.bf16.msra.mxu0 %v914
    %1292 = vmatprep.subr.bf16.mxu0 %v919
    %1293 = vmatpush1.bf16.msra.mxu0 %v918
    %1294 = vmatprep.subr.bf16.mxu0 %v923
    %1295 = vmatpush1.bf16.msra.mxu0 %v922
    %1296 = vmatprep.subr.bf16.mxu0 %v927
    %1297 = vmatpush1.bf16.msra.mxu0 %v926
    %1298 = vmatprep.subr.bf16.mxu0 %v931
    %1299 = vmatpush1.bf16.msra.mxu0 %v930
    %1300 = vmatprep.subr.bf16.mxu0 %v935
    %1301 = vmatpush1.bf16.msra.mxu0 %v934
    %1302 = vmatprep.mubr.bf16.mxu0 %v62
    %1303 = vmatmul.mubr.bf16.gmra.mrb[0].mxu0 %v61
    %v1304 = vpop.f32.mrb[0].mxu0
    %v1305 = vadd.f32 %v269, %v1304
    %v1306 = vpop.f32.mrb[0].mxu0
    %v1307 = vadd.f32 %v273, %v1306
    %v1308 = vpop.f32.mrb[0].mxu0
    %v1309 = vpop.f32.mrb[0].mxu0
    %1310 = vdwg.mxu0
    %1311 = vmatprep.subr.bf16.mxu0 %v939
    %1312 = vmatpush1.bf16.msra.mxu0 %v938
    %1313 = vmatprep.subr.bf16.mxu0 %v943
    %1314 = vmatpush1.bf16.msra.mxu0 %v942
    %1315 = vmatprep.subr.bf16.mxu0 %v947
    %1316 = vmatpush1.bf16.msra.mxu0 %v946
    %1317 = vmatprep.subr.bf16.mxu0 %v951
    %1318 = vmatpush1.bf16.msra.mxu0 %v950
    %1319 = vmatprep.subr.bf16.mxu0 %v955
    %1320 = vmatpush1.bf16.msra.mxu0 %v954
    %1321 = vmatprep.subr.bf16.mxu0 %v959
    %1322 = vmatpush1.bf16.msra.mxu0 %v958
    %1323 = vmatprep.subr.bf16.mxu0 %v963
    %1324 = vmatpush1.bf16.msra.mxu0 %v962
    %1325 = vmatprep.subr.bf16.mxu0 %v967
    %1326 = vmatpush1.bf16.msra.mxu0 %v966
    %1327 = vmatprep.subr.bf16.mxu0 %v971
    %1328 = vmatpush1.bf16.msra.mxu0 %v970
    %1329 = vmatprep.subr.bf16.mxu0 %v975
    %1330 = vmatpush1.bf16.msra.mxu0 %v974
    %1331 = vmatprep.subr.bf16.mxu0 %v979
    %1332 = vmatpush1.bf16.msra.mxu0 %v978
    %1333 = vmatprep.subr.bf16.mxu0 %v983
    %1334 = vmatpush1.bf16.msra.mxu0 %v982
    %1335 = vmatprep.subr.bf16.mxu0 %v987
    %1336 = vmatpush1.bf16.msra.mxu0 %v986
    %1337 = vmatprep.subr.bf16.mxu0 %v991
    %1338 = vmatpush1.bf16.msra.mxu0 %v990
    %1339 = vmatprep.subr.bf16.mxu0 %v995
    %1340 = vmatpush1.bf16.msra.mxu0 %v994
    %1341 = vmatprep.subr.bf16.mxu0 %v999
    %1342 = vmatpush1.bf16.msra.mxu0 %v998
    %1343 = vmatprep.mubr.bf16.mxu0 %v64
    %1344 = vmatmul.mubr.bf16.gmra.mrb[0].mxu0 %v63
    %v1345 = vpop.f32.mrb[0].mxu0
    %v1346 = vadd.f32 %v1305, %v1345
    %v1347 = vpop.f32.mrb[0].mxu0
    %v1348 = vadd.f32 %v1307, %v1347
    %v1349 = vpop.f32.mrb[0].mxu0
    %v1350 = vpop.f32.mrb[0].mxu0
    %1351 = vdwg.mxu0
    %1352 = vmatprep.subr.bf16.mxu0 %v1003
    %1353 = vmatpush1.bf16.msra.mxu0 %v1002
    %1354 = vmatprep.subr.bf16.mxu0 %v1007
    %1355 = vmatpush1.bf16.msra.mxu0 %v1006
    %1356 = vmatprep.subr.bf16.mxu0 %v1011
    %1357 = vmatpush1.bf16.msra.mxu0 %v1010
    %1358 = vmatprep.subr.bf16.mxu0 %v1015
    %1359 = vmatpush1.bf16.msra.mxu0 %v1014
    %1360 = vmatprep.subr.bf16.mxu0 %v1019
    %1361 = vmatpush1.bf16.msra.mxu0 %v1018
    %1362 = vmatprep.subr.bf16.mxu0 %v1023
    %1363 = vmatpush1.bf16.msra.mxu0 %v1022
    %1364 = vmatprep.subr.bf16.mxu0 %v1027
    %1365 = vmatpush1.bf16.msra.mxu0 %v1026
    %1366 = vmatprep.subr.bf16.mxu0 %v1031
    %1367 = vmatpush1.bf16.msra.mxu0 %v1030
    %1368 = vmatprep.subr.bf16.mxu0 %v1035
    %1369 = vmatpush1.bf16.msra.mxu0 %v1034
    %1370 = vmatprep.subr.bf16.mxu0 %v1039
    %1371 = vmatpush1.bf16.msra.mxu0 %v1038
    %1372 = vmatprep.subr.bf16.mxu0 %v1043
    %1373 = vmatpush1.bf16.msra.mxu0 %v1042
    %1374 = vmatprep.subr.bf16.mxu0 %v1047
    %1375 = vmatpush1.bf16.msra.mxu0 %v1046
    %1376 = vmatprep.subr.bf16.mxu0 %v1051
    %1377 = vmatpush1.bf16.msra.mxu0 %v1050
    %1378 = vmatprep.subr.bf16.mxu0 %v1055
    %1379 = vmatpush1.bf16.msra.mxu0 %v1054
    %1380 = vmatprep.subr.bf16.mxu0 %v1059
    %1381 = vmatpush1.bf16.msra.mxu0 %v1058
    %1382 = vmatprep.subr.bf16.mxu0 %v1063
    %1383 = vmatpush1.bf16.msra.mxu0 %v1062
    %1384 = vmatprep.mubr.bf16.mxu0 %v66
    %1385 = vmatmul.mubr.bf16.gmra.mrb[0].mxu0 %v65
    %v1386 = vpop.f32.mrb[0].mxu0
    %v1387 = vadd.f32 %v1346, %v1386
    %v1388 = vpop.f32.mrb[0].mxu0
    %v1389 = vadd.f32 %v1348, %v1388
    %v1390 = vpop.f32.mrb[0].mxu0
    %v1391 = vpop.f32.mrb[0].mxu0
    %1392 = vdwg.mxu0
    %1393 = vmatprep.subr.bf16.mxu0 %v1067
    %1394 = vmatpush1.bf16.msra.mxu0 %v1066
    %1395 = vmatprep.subr.bf16.mxu0 0
    %1396 = vmatpush1.bf16.msra.mxu0 0
    %1397 = vmatprep.subr.bf16.mxu0 0
    %1398 = vmatpush1.bf16.msra.mxu0 0
    %1399 = vmatprep.subr.bf16.mxu0 0
    %1400 = vmatpush1.bf16.msra.mxu0 0
    %1401 = vmatprep.subr.bf16.mxu0 0
    %1402 = vmatpush1.bf16.msra.mxu0 0
    %1403 = vmatprep.subr.bf16.mxu0 0
    %1404 = vmatpush1.bf16.msra.mxu0 0
    %1405 = vmatprep.subr.bf16.mxu0 0
    %1406 = vmatpush1.bf16.msra.mxu0 0
    %1407 = vmatprep.subr.bf16.mxu0 0
    %1408 = vmatpush1.bf16.msra.mxu0 0
    %1409 = vmatprep.subr.bf16.mxu0 0
    %1410 = vmatpush1.bf16.msra.mxu0 0
    %1411 = vmatprep.subr.bf16.mxu0 0
    %1412 = vmatpush1.bf16.msra.mxu0 0
    %1413 = vmatprep.subr.bf16.mxu0 0
    %1414 = vmatpush1.bf16.msra.mxu0 0
    %1415 = vmatprep.subr.bf16.mxu0 0
    %1416 = vmatpush1.bf16.msra.mxu0 0
    %1417 = vmatprep.subr.bf16.mxu0 0
    %1418 = vmatpush1.bf16.msra.mxu0 0
    %1419 = vmatprep.subr.bf16.mxu0 0
    %1420 = vmatpush1.bf16.msra.mxu0 0
    %1421 = vmatprep.subr.bf16.mxu0 0
    %1422 = vmatpush1.bf16.msra.mxu0 0
    %1423 = vmatprep.subr.bf16.mxu0 0
    %1424 = vmatpush1.bf16.msra.mxu0 0
    %1425 = vmatprep.mubr.bf16.mxu0 0
    %1426 = vmatmul.mubr.bf16.gmra.mrb[0].mxu0 %v1268
    %v1427 = vpop.f32.mrb[0].mxu0
    %v1428 = vadd.f32 %v1387, %v1427
    %v1429 = vpop.f32.mrb[0].mxu0
    %v1430 = vadd.f32 %v1389, %v1429
    %v1431 = vpop.f32.mrb[0].mxu0
    %v1432 = vpop.f32.mrb[0].mxu0
    %1433 = vdwg.mxu0
    %1434 = vmatprep.subr.bf16.mxu0 %v877
    %1435 = vmatpush1.bf16.msra.mxu0 %v876
    %1436 = vmatprep.subr.bf16.mxu0 %v881
    %1437 = vmatpush1.bf16.msra.mxu0 %v880
    %1438 = vmatprep.subr.bf16.mxu0 %v885
    %1439 = vmatpush1.bf16.msra.mxu0 %v884
    %1440 = vmatprep.subr.bf16.mxu0 %v889
    %1441 = vmatpush1.bf16.msra.mxu0 %v888
    %1442 = vmatprep.subr.bf16.mxu0 %v893
    %1443 = vmatpush1.bf16.msra.mxu0 %v892
    %1444 = vmatprep.subr.bf16.mxu0 %v897
    %1445 = vmatpush1.bf16.msra.mxu0 %v896
    %1446 = vmatprep.subr.bf16.mxu0 %v901
    %1447 = vmatpush1.bf16.msra.mxu0 %v900
    %1448 = vmatprep.subr.bf16.mxu0 %v905
    %1449 = vmatpush1.bf16.msra.mxu0 %v904
    %1450 = vmatprep.subr.bf16.mxu0 %v909
    %1451 = vmatpush1.bf16.msra.mxu0 %v908
    %1452 = vmatprep.subr.bf16.mxu0 %v913
    %1453 = vmatpush1.bf16.msra.mxu0 %v912
    %1454 = vmatprep.subr.bf16.mxu0 %v917
    %1455 = vmatpush1.bf16.msra.mxu0 %v916
    %1456 = vmatprep.subr.bf16.mxu0 %v921
    %1457 = vmatpush1.bf16.msra.mxu0 %v920
    %1458 = vmatprep.subr.bf16.mxu0 %v925
    %1459 = vmatpush1.bf16.msra.mxu0 %v924
    %1460 = vmatprep.subr.bf16.mxu0 %v929
    %1461 = vmatpush1.bf16.msra.mxu0 %v928
    %1462 = vmatprep.subr.bf16.mxu0 %v933
    %1463 = vmatpush1.bf16.msra.mxu0 %v932
    %1464 = vmatprep.subr.bf16.mxu0 %v937
    %1465 = vmatpush1.bf16.msra.mxu0 %v936
    %1466 = vmatprep.mubr.bf16.mxu0 %v62
    %1467 = vmatmul.mubr.bf16.gmra.mrb[0].mxu0 %v61
    %v1468 = vpop.f32.mrb[0].mxu0
    %v1469 = vadd.f32 %v277, %v1468
    %v1470 = vpop.f32.mrb[0].mxu0
    %v1471 = vadd.f32 %v281, %v1470
    %v1472 = vpop.f32.mrb[0].mxu0
    %v1473 = vpop.f32.mrb[0].mxu0
    %1474 = vdwg.mxu0
    %1475 = vmatprep.subr.bf16.mxu0 %v941
    %1476 = vmatpush1.bf16.msra.mxu0 %v940
    %1477 = vmatprep.subr.bf16.mxu0 %v945
    %1478 = vmatpush1.bf16.msra.mxu0 %v944
    %1479 = vmatprep.subr.bf16.mxu0 %v949
    %1480 = vmatpush1.bf16.msra.mxu0 %v948
    %1481 = vmatprep.subr.bf16.mxu0 %v953
    %1482 = vmatpush1.bf16.msra.mxu0 %v952
    %1483 = vmatprep.subr.bf16.mxu0 %v957
    %1484 = vmatpush1.bf16.msra.mxu0 %v956
    %1485 = vmatprep.subr.bf16.mxu0 %v961
    %1486 = vmatpush1.bf16.msra.mxu0 %v960
    %1487 = vmatprep.subr.bf16.mxu0 %v965
    %1488 = vmatpush1.bf16.msra.mxu0 %v964
    %1489 = vmatprep.subr.bf16.mxu0 %v969
    %1490 = vmatpush1.bf16.msra.mxu0 %v968
    %1491 = vmatprep.subr.bf16.mxu0 %v973
    %1492 = vmatpush1.bf16.msra.mxu0 %v972
    %1493 = vmatprep.subr.bf16.mxu0 %v977
    %1494 = vmatpush1.bf16.msra.mxu0 %v976
    %1495 = vmatprep.subr.bf16.mxu0 %v981
    %1496 = vmatpush1.bf16.msra.mxu0 %v980
    %1497 = vmatprep.subr.bf16.mxu0 %v985
    %1498 = vmatpush1.bf16.msra.mxu0 %v984
    %1499 = vmatprep.subr.bf16.mxu0 %v989
    %1500 = vmatpush1.bf16.msra.mxu0 %v988
    %1501 = vmatprep.subr.bf16.mxu0 %v993
    %1502 = vmatpush1.bf16.msra.mxu0 %v992
    %1503 = vmatprep.subr.bf16.mxu0 %v997
    %1504 = vmatpush1.bf16.msra.mxu0 %v996
    %1505 = vmatprep.subr.bf16.mxu0 %v1001
    %1506 = vmatpush1.bf16.msra.mxu0 %v1000
    %1507 = vmatprep.mubr.bf16.mxu0 %v64
    %1508 = vmatmul.mubr.bf16.gmra.mrb[0].mxu0 %v63
    %v1509 = vpop.f32.mrb[0].mxu0
    %v1510 = vadd.f32 %v1469, %v1509
    %v1511 = vpop.f32.mrb[0].mxu0
    %v1512 = vadd.f32 %v1471, %v1511
    %v1513 = vpop.f32.mrb[0].mxu0
    %v1514 = vpop.f32.mrb[0].mxu0
    %1515 = vdwg.mxu0
    %1516 = vmatprep.subr.bf16.mxu0 %v1005
    %1517 = vmatpush1.bf16.msra.mxu0 %v1004
    %1518 = vmatprep.subr.bf16.mxu0 %v1009
    %1519 = vmatpush1.bf16.msra.mxu0 %v1008
    %1520 = vmatprep.subr.bf16.mxu0 %v1013
    %1521 = vmatpush1.bf16.msra.mxu0 %v1012
    %1522 = vmatprep.subr.bf16.mxu0 %v1017
    %1523 = vmatpush1.bf16.msra.mxu0 %v1016
    %1524 = vmatprep.subr.bf16.mxu0 %v1021
    %1525 = vmatpush1.bf16.msra.mxu0 %v1020
    %1526 = vmatprep.subr.bf16.mxu0 %v1025
    %1527 = vmatpush1.bf16.msra.mxu0 %v1024
    %1528 = vmatprep.subr.bf16.mxu0 %v1029
    %1529 = vmatpush1.bf16.msra.mxu0 %v1028
    %1530 = vmatprep.subr.bf16.mxu0 %v1033
    %1531 = vmatpush1.bf16.msra.mxu0 %v1032
    %1532 = vmatprep.subr.bf16.mxu0 %v1037
    %1533 = vmatpush1.bf16.msra.mxu0 %v1036
    %1534 = vmatprep.subr.bf16.mxu0 %v1041
    %1535 = vmatpush1.bf16.msra.mxu0 %v1040
    %1536 = vmatprep.subr.bf16.mxu0 %v1045
    %1537 = vmatpush1.bf16.msra.mxu0 %v1044
    %1538 = vmatprep.subr.bf16.mxu0 %v1049
    %1539 = vmatpush1.bf16.msra.mxu0 %v1048
    %1540 = vmatprep.subr.bf16.mxu0 %v1053
    %1541 = vmatpush1.bf16.msra.mxu0 %v1052
    %1542 = vmatprep.subr.bf16.mxu0 %v1057
    %1543 = vmatpush1.bf16.msra.mxu0 %v1056
    %1544 = vmatprep.subr.bf16.mxu0 %v1061
    %1545 = vmatpush1.bf16.msra.mxu0 %v1060
    %1546 = vmatprep.subr.bf16.mxu0 %v1065
    %1547 = vmatpush1.bf16.msra.mxu0 %v1064
    %1548 = vmatprep.mubr.bf16.mxu0 %v66
    %1549 = vmatmul.mubr.bf16.gmra.mrb[0].mxu0 %v65
    %v1550 = vpop.f32.mrb[0].mxu0
    %v1551 = vadd.f32 %v1510, %v1550
    %v1552 = vpop.f32.mrb[0].mxu0
    %v1553 = vadd.f32 %v1512, %v1552
    %v1554 = vpop.f32.mrb[0].mxu0
    %v1555 = vpop.f32.mrb[0].mxu0
    %1556 = vdwg.mxu0
    %1557 = vmatprep.subr.bf16.mxu0 %v1069
    %1558 = vmatpush1.bf16.msra.mxu0 %v1068
    %1559 = vmatprep.subr.bf16.mxu0 0
    %1560 = vmatpush1.bf16.msra.mxu0 0
    %1561 = vmatprep.subr.bf16.mxu0 0
    %1562 = vmatpush1.bf16.msra.mxu0 0
    %1563 = vmatprep.subr.bf16.mxu0 0
    %1564 = vmatpush1.bf16.msra.mxu0 0
    %1565 = vmatprep.subr.bf16.mxu0 0
    %1566 = vmatpush1.bf16.msra.mxu0 0
    %1567 = vmatprep.subr.bf16.mxu0 0
    %1568 = vmatpush1.bf16.msra.mxu0 0
    %1569 = vmatprep.subr.bf16.mxu0 0
    %1570 = vmatpush1.bf16.msra.mxu0 0
    %1571 = vmatprep.subr.bf16.mxu0 0
    %1572 = vmatpush1.bf16.msra.mxu0 0
    %1573 = vmatprep.subr.bf16.mxu0 0
    %1574 = vmatpush1.bf16.msra.mxu0 0
    %1575 = vmatprep.subr.bf16.mxu0 0
    %1576 = vmatpush1.bf16.msra.mxu0 0
    %1577 = vmatprep.subr.bf16.mxu0 0
    %1578 = vmatpush1.bf16.msra.mxu0 0
    %1579 = vmatprep.subr.bf16.mxu0 0
    %1580 = vmatpush1.bf16.msra.mxu0 0
    %1581 = vmatprep.subr.bf16.mxu0 0
    %1582 = vmatpush1.bf16.msra.mxu0 0
    %1583 = vmatprep.subr.bf16.mxu0 0
    %1584 = vmatpush1.bf16.msra.mxu0 0
    %1585 = vmatprep.subr.bf16.mxu0 0
    %1586 = vmatpush1.bf16.msra.mxu0 0
    %1587 = vmatprep.subr.bf16.mxu0 0
    %1588 = vmatpush1.bf16.msra.mxu0 0
    %1589 = vmatprep.mubr.bf16.mxu0 0
    %1590 = vmatmul.mubr.bf16.gmra.mrb[0].mxu0 %v1268
    %v1591 = vpop.f32.mrb[0].mxu0
    %v1592 = vadd.f32 %v1551, %v1591
    %v1593 = vpop.f32.mrb[0].mxu0
    %v1594 = vadd.f32 %v1553, %v1593
    %v1595 = vpop.f32.mrb[0].mxu0
    %v1596 = vpop.f32.mrb[0].mxu0
    %1597 = vdwg.mxu0
    %v1598 = vmax.f32 %v1428, 0.0
    %v1599 = vmax.f32 %v1430, 0.0
    %v1600 = vmax.f32 %v1592, 0.0
    %v1601 = vmax.f32 %v1594, 0.0
    %v1602 = vpack.c.bf16 %v1598, %v1598
    %v1603 = vpack.c.bf16 %v1599, %v1599
    %v1604 = vpack.c.bf16 %v1600, %v1600
    %v1605 = vpack.c.bf16 %v1601, %v1601
    %v1606 = vld [vmem:[%s3] sm:$0xff]
    %v1607 = vld [vmem:[%s3 + $0x8] sm:$0xff]
    %v1608 = vld [vmem:[%s3 + $0x10] sm:$0xff]
    %v1609 = vld [vmem:[%s3 + $0x18] sm:$0xff]
    %v1610 = vld [vmem:[%s3 + $0x20] sm:$0xff]
    %v1611 = vld [vmem:[%s3 + $0x28] sm:$0xff]
    %v1612 = vld [vmem:[%s3 + $0x30] sm:$0xff]
    %v1613 = vld [vmem:[%s3 + $0x38] sm:$0xff]
    %v1614 = vld [vmem:[%s3 + $0x40] sm:$0xff]
    %v1615 = vld [vmem:[%s3 + $0x48] sm:$0xff]
    %v1616 = vld [vmem:[%s3 + $0x50] sm:$0xff]
    %v1617 = vld [vmem:[%s3 + $0x58] sm:$0xff]
    %v1618 = vld [vmem:[%s3 + $0x60] sm:$0xff]
    %v1619 = vld [vmem:[%s3 + $0x68] sm:$0xff]
    %v1620 = vld [vmem:[%s3 + $0x70] sm:$0xff]
    %v1621 = vld [vmem:[%s3 + $0x78] sm:$0xff]
    %v1622 = vld [vmem:[%s3 + $0x80] sm:$0xff]
    %v1623 = vld [vmem:[%s3 + $0x88] sm:$0xff]
    %v1624 = vld [vmem:[%s3 + $0x90] sm:$0xff]
    %v1625 = vld [vmem:[%s3 + $0x98] sm:$0xff]
    %v1626 = vld [vmem:[%s3 + $0xa0] sm:$0xff]
    %v1627 = vld [vmem:[%s3 + $0xa8] sm:$0xff]
    %v1628 = vld [vmem:[%s3 + $0xb0] sm:$0xff]
    %v1629 = vld [vmem:[%s3 + $0xb8] sm:$0xff]
    %v1630 = vld [vmem:[%s3 + $0xc0] sm:$0xff]
    %v1631 = vld [vmem:[%s3 + $0xc8] sm:$0xff]
    %v1632 = vld [vmem:[%s3 + $0xd0] sm:$0xff]
    %v1633 = vld [vmem:[%s3 + $0xd8] sm:$0xff]
    %v1634 = vld [vmem:[%s3 + $0xe0] sm:$0xff]
    %v1635 = vld [vmem:[%s3 + $0xe8] sm:$0xff]
    %v1636 = vld [vmem:[%s3 + $0xf0] sm:$0xff]
    %v1637 = vld [vmem:[%s3 + $0xf8] sm:$0xff]
    %v1638 = vld [vmem:[%s3 + $0x100] sm:$0xff]
    %v1639 = vld [vmem:[%s3 + $0x108] sm:$0xff]
    %v1640 = vld [vmem:[%s3 + $0x110] sm:$0xff]
    %v1641 = vld [vmem:[%s3 + $0x118] sm:$0xff]
    %v1642 = vld [vmem:[%s3 + $0x120] sm:$0xff]
    %v1643 = vld [vmem:[%s3 + $0x128] sm:$0xff]
    %v1644 = vld [vmem:[%s3 + $0x130] sm:$0xff]
    %v1645 = vld [vmem:[%s3 + $0x138] sm:$0xff]
    %v1646 = vld [vmem:[%s3 + $0x140] sm:$0xff]
    %v1647 = vld [vmem:[%s3 + $0x148] sm:$0xff]
    %v1648 = vld [vmem:[%s3 + $0x150] sm:$0xff]
    %v1649 = vld [vmem:[%s3 + $0x158] sm:$0xff]
    %v1650 = vld [vmem:[%s3 + $0x160] sm:$0xff]
    %v1651 = vld [vmem:[%s3 + $0x168] sm:$0xff]
    %v1652 = vld [vmem:[%s3 + $0x170] sm:$0xff]
    %v1653 = vld [vmem:[%s3 + $0x178] sm:$0xff]
    %v1654 = vld [vmem:[%s3 + $0x180] sm:$0xff]
    %v1655 = vld [vmem:[%s3 + $0x188] sm:$0xff]
    %v1656 = vld [vmem:[%s3 + $0x190] sm:$0xff]
    %v1657 = vld [vmem:[%s3 + $0x198] sm:$0xff]
    %v1658 = vld [vmem:[%s3 + $0x1a0] sm:$0xff]
    %v1659 = vld [vmem:[%s3 + $0x1a8] sm:$0xff]
    %v1660 = vld [vmem:[%s3 + $0x1b0] sm:$0xff]
    %v1661 = vld [vmem:[%s3 + $0x1b8] sm:$0xff]
    %v1662 = vld [vmem:[%s3 + $0x1c0] sm:$0xff]
    %v1663 = vld [vmem:[%s3 + $0x1c8] sm:$0xff]
    %v1664 = vld [vmem:[%s3 + $0x1d0] sm:$0xff]
    %v1665 = vld [vmem:[%s3 + $0x1d8] sm:$0xff]
    %v1666 = vld [vmem:[%s3 + $0x1e0] sm:$0xff]
    %v1667 = vld [vmem:[%s3 + $0x1e8] sm:$0xff]
    %v1668 = vld [vmem:[%s3 + $0x1f0] sm:$0xff]
    %v1669 = vld [vmem:[%s3 + $0x1f8] sm:$0xff]
    %v1670 = vld [vmem:[%s4] sm:$0x3]
    %v1672 = vlaneseq
    %v1673 = vshrl.u32 %v1672, 7
    %v1674 = vsub.s32 0, %v1673
    %v1675 = vrot.slane %v1670, %v1674
    %v1676 = vlaneseq
    %v1677 = vshrl.u32 %v1676, 7
    %v1678 = vsub.s32 1, %v1677
    %v1679 = vrot.slane %v1670, %v1678
    %v1746 = vunpack.c.l.b16 %v1606
    %v1747 = vunpack.c.h.b16 %v1606
    %v1748 = vunpack.c.l.b16 %v1607
    %v1749 = vunpack.c.h.b16 %v1607
    %v1750 = vunpack.c.l.b16 %v1608
    %v1751 = vunpack.c.h.b16 %v1608
    %v1752 = vunpack.c.l.b16 %v1609
    %v1753 = vunpack.c.h.b16 %v1609
    %v1754 = vunpack.c.l.b16 %v1610
    %v1755 = vunpack.c.h.b16 %v1610
    %v1756 = vunpack.c.l.b16 %v1611
    %v1757 = vunpack.c.h.b16 %v1611
    %v1758 = vunpack.c.l.b16 %v1612
    %v1759 = vunpack.c.h.b16 %v1612
    %v1760 = vunpack.c.l.b16 %v1613
    %v1761 = vunpack.c.h.b16 %v1613
    %v1762 = vunpack.c.l.b16 %v1614
    %v1763 = vunpack.c.h.b16 %v1614
    %v1764 = vunpack.c.l.b16 %v1615
    %v1765 = vunpack.c.h.b16 %v1615
    %v1766 = vunpack.c.l.b16 %v1616
    %v1767 = vunpack.c.h.b16 %v1616
    %v1768 = vunpack.c.l.b16 %v1617
    %v1769 = vunpack.c.h.b16 %v1617
    %v1770 = vunpack.c.l.b16 %v1618
    %v1771 = vunpack.c.h.b16 %v1618
    %v1772 = vunpack.c.l.b16 %v1619
    %v1773 = vunpack.c.h.b16 %v1619
    %v1774 = vunpack.c.l.b16 %v1620
    %v1775 = vunpack.c.h.b16 %v1620
    %v1776 = vunpack.c.l.b16 %v1621
    %v1777 = vunpack.c.h.b16 %v1621
    %v1778 = vunpack.c.l.b16 %v1622
    %v1779 = vunpack.c.h.b16 %v1622
    %v1780 = vunpack.c.l.b16 %v1623
    %v1781 = vunpack.c.h.b16 %v1623
    %v1782 = vunpack.c.l.b16 %v1624
    %v1783 = vunpack.c.h.b16 %v1624
    %v1784 = vunpack.c.l.b16 %v1625
    %v1785 = vunpack.c.h.b16 %v1625
    %v1786 = vunpack.c.l.b16 %v1626
    %v1787 = vunpack.c.h.b16 %v1626
    %v1788 = vunpack.c.l.b16 %v1627
    %v1789 = vunpack.c.h.b16 %v1627
    %v1790 = vunpack.c.l.b16 %v1628
    %v1791 = vunpack.c.h.b16 %v1628
    %v1792 = vunpack.c.l.b16 %v1629
    %v1793 = vunpack.c.h.b16 %v1629
    %v1794 = vunpack.c.l.b16 %v1630
    %v1795 = vunpack.c.h.b16 %v1630
    %v1796 = vunpack.c.l.b16 %v1631
    %v1797 = vunpack.c.h.b16 %v1631
    %v1798 = vunpack.c.l.b16 %v1632
    %v1799 = vunpack.c.h.b16 %v1632
    %v1800 = vunpack.c.l.b16 %v1633
    %v1801 = vunpack.c.h.b16 %v1633
    %v1802 = vunpack.c.l.b16 %v1634
    %v1803 = vunpack.c.h.b16 %v1634
    %v1804 = vunpack.c.l.b16 %v1635
    %v1805 = vunpack.c.h.b16 %v1635
    %v1806 = vunpack.c.l.b16 %v1636
    %v1807 = vunpack.c.h.b16 %v1636
    %v1808 = vunpack.c.l.b16 %v1637
    %v1809 = vunpack.c.h.b16 %v1637
    %v1810 = vunpack.c.l.b16 %v1638
    %v1811 = vunpack.c.h.b16 %v1638
    %v1812 = vunpack.c.l.b16 %v1639
    %v1813 = vunpack.c.h.b16 %v1639
    %v1814 = vunpack.c.l.b16 %v1640
    %v1815 = vunpack.c.h.b16 %v1640
    %v1816 = vunpack.c.l.b16 %v1641
    %v1817 = vunpack.c.h.b16 %v1641
    %v1818 = vunpack.c.l.b16 %v1642
    %v1819 = vunpack.c.h.b16 %v1642
    %v1820 = vunpack.c.l.b16 %v1643
    %v1821 = vunpack.c.h.b16 %v1643
    %v1822 = vunpack.c.l.b16 %v1644
    %v1823 = vunpack.c.h.b16 %v1644
    %v1824 = vunpack.c.l.b16 %v1645
    %v1825 = vunpack.c.h.b16 %v1645
    %v1826 = vunpack.c.l.b16 %v1646
    %v1827 = vunpack.c.h.b16 %v1646
    %v1828 = vunpack.c.l.b16 %v1647
    %v1829 = vunpack.c.h.b16 %v1647
    %v1830 = vunpack.c.l.b16 %v1648
    %v1831 = vunpack.c.h.b16 %v1648
    %v1832 = vunpack.c.l.b16 %v1649
    %v1833 = vunpack.c.h.b16 %v1649
    %v1834 = vunpack.c.l.b16 %v1650
    %v1835 = vunpack.c.h.b16 %v1650
    %v1836 = vunpack.c.l.b16 %v1651
    %v1837 = vunpack.c.h.b16 %v1651
    %v1838 = vunpack.c.l.b16 %v1652
    %v1839 = vunpack.c.h.b16 %v1652
    %v1840 = vunpack.c.l.b16 %v1653
    %v1841 = vunpack.c.h.b16 %v1653
    %v1842 = vunpack.c.l.b16 %v1654
    %v1843 = vunpack.c.h.b16 %v1654
    %v1844 = vunpack.c.l.b16 %v1655
    %v1845 = vunpack.c.h.b16 %v1655
    %v1846 = vunpack.c.l.b16 %v1656
    %v1847 = vunpack.c.h.b16 %v1656
    %v1848 = vunpack.c.l.b16 %v1657
    %v1849 = vunpack.c.h.b16 %v1657
    %v1850 = vunpack.c.l.b16 %v1658
    %v1851 = vunpack.c.h.b16 %v1658
    %v1852 = vunpack.c.l.b16 %v1659
    %v1853 = vunpack.c.h.b16 %v1659
    %v1854 = vunpack.c.l.b16 %v1660
    %v1855 = vunpack.c.h.b16 %v1660
    %v1856 = vunpack.c.l.b16 %v1661
    %v1857 = vunpack.c.h.b16 %v1661
    %v1858 = vunpack.c.l.b16 %v1662
    %v1859 = vunpack.c.h.b16 %v1662
    %v1860 = vunpack.c.l.b16 %v1663
    %v1861 = vunpack.c.h.b16 %v1663
    %v1862 = vunpack.c.l.b16 %v1664
    %v1863 = vunpack.c.h.b16 %v1664
    %v1864 = vunpack.c.l.b16 %v1665
    %v1865 = vunpack.c.h.b16 %v1665
    %v1866 = vunpack.c.l.b16 %v1666
    %v1867 = vunpack.c.h.b16 %v1666
    %v1868 = vunpack.c.l.b16 %v1667
    %v1869 = vunpack.c.h.b16 %v1667
    %v1870 = vunpack.c.l.b16 %v1668
    %v1871 = vunpack.c.h.b16 %v1668
    %v1872 = vunpack.c.l.b16 %v1669
    %v1873 = vunpack.c.h.b16 %v1669
    %v1874 = vpack.c.b16 %v1748, %v1746
    %v1875 = vpack.c.b16 %v1749, %v1747
    %v1876 = vpack.c.b16 %v1752, %v1750
    %v1877 = vpack.c.b16 %v1753, %v1751
    %v1878 = vpack.c.b16 %v1756, %v1754
    %v1879 = vpack.c.b16 %v1757, %v1755
    %v1880 = vpack.c.b16 %v1760, %v1758
    %v1881 = vpack.c.b16 %v1761, %v1759
    %v1882 = vpack.c.b16 %v1764, %v1762
    %v1883 = vpack.c.b16 %v1765, %v1763
    %v1884 = vpack.c.b16 %v1768, %v1766
    %v1885 = vpack.c.b16 %v1769, %v1767
    %v1886 = vpack.c.b16 %v1772, %v1770
    %v1887 = vpack.c.b16 %v1773, %v1771
    %v1888 = vpack.c.b16 %v1776, %v1774
    %v1889 = vpack.c.b16 %v1777, %v1775
    %v1890 = vpack.c.b16 %v1780, %v1778
    %v1891 = vpack.c.b16 %v1781, %v1779
    %v1892 = vpack.c.b16 %v1784, %v1782
    %v1893 = vpack.c.b16 %v1785, %v1783
    %v1894 = vpack.c.b16 %v1788, %v1786
    %v1895 = vpack.c.b16 %v1789, %v1787
    %v1896 = vpack.c.b16 %v1792, %v1790
    %v1897 = vpack.c.b16 %v1793, %v1791
    %v1898 = vpack.c.b16 %v1796, %v1794
    %v1899 = vpack.c.b16 %v1797, %v1795
    %v1900 = vpack.c.b16 %v1800, %v1798
    %v1901 = vpack.c.b16 %v1801, %v1799
    %v1902 = vpack.c.b16 %v1804, %v1802
    %v1903 = vpack.c.b16 %v1805, %v1803
    %v1904 = vpack.c.b16 %v1808, %v1806
    %v1905 = vpack.c.b16 %v1809, %v1807
    %v1906 = vpack.c.b16 %v1812, %v1810
    %v1907 = vpack.c.b16 %v1813, %v1811
    %v1908 = vpack.c.b16 %v1816, %v1814
    %v1909 = vpack.c.b16 %v1817, %v1815
    %v1910 = vpack.c.b16 %v1820, %v1818
    %v1911 = vpack.c.b16 %v1821, %v1819
    %v1912 = vpack.c.b16 %v1824, %v1822
    %v1913 = vpack.c.b16 %v1825, %v1823
    %v1914 = vpack.c.b16 %v1828, %v1826
    %v1915 = vpack.c.b16 %v1829, %v1827
    %v1916 = vpack.c.b16 %v1832, %v1830
    %v1917 = vpack.c.b16 %v1833, %v1831
    %v1918 = vpack.c.b16 %v1836, %v1834
    %v1919 = vpack.c.b16 %v1837, %v1835
    %v1920 = vpack.c.b16 %v1840, %v1838
    %v1921 = vpack.c.b16 %v1841, %v1839
    %v1922 = vpack.c.b16 %v1844, %v1842
    %v1923 = vpack.c.b16 %v1845, %v1843
    %v1924 = vpack.c.b16 %v1848, %v1846
    %v1925 = vpack.c.b16 %v1849, %v1847
    %v1926 = vpack.c.b16 %v1852, %v1850
    %v1927 = vpack.c.b16 %v1853, %v1851
    %v1928 = vpack.c.b16 %v1856, %v1854
    %v1929 = vpack.c.b16 %v1857, %v1855
    %v1930 = vpack.c.b16 %v1860, %v1858
    %v1931 = vpack.c.b16 %v1861, %v1859
    %v1932 = vpack.c.b16 %v1864, %v1862
    %v1933 = vpack.c.b16 %v1865, %v1863
    %v1934 = vpack.c.b16 %v1868, %v1866
    %v1935 = vpack.c.b16 %v1869, %v1867
    %v1936 = vpack.c.b16 %v1872, %v1870
    %v1937 = vpack.c.b16 %v1873, %v1871
    %2002 = vmatprep.subr.bf16.mxu0 %v1875
    %2003 = vmatpush1.bf16.msra.mxu0 %v1874
    %2004 = vmatprep.subr.bf16.mxu0 %v1877
    %2005 = vmatpush1.bf16.msra.mxu0 %v1876
    %2006 = vmatprep.subr.bf16.mxu0 %v1879
    %2007 = vmatpush1.bf16.msra.mxu0 %v1878
    %2008 = vmatprep.subr.bf16.mxu0 %v1881
    %2009 = vmatpush1.bf16.msra.mxu0 %v1880
    %2010 = vmatprep.subr.bf16.mxu0 %v1883
    %2011 = vmatpush1.bf16.msra.mxu0 %v1882
    %2012 = vmatprep.subr.bf16.mxu0 %v1885
    %2013 = vmatpush1.bf16.msra.mxu0 %v1884
    %2014 = vmatprep.subr.bf16.mxu0 %v1887
    %2015 = vmatpush1.bf16.msra.mxu0 %v1886
    %2016 = vmatprep.subr.bf16.mxu0 %v1889
    %2017 = vmatpush1.bf16.msra.mxu0 %v1888
    %2018 = vmatprep.subr.bf16.mxu0 %v1891
    %2019 = vmatpush1.bf16.msra.mxu0 %v1890
    %2020 = vmatprep.subr.bf16.mxu0 %v1893
    %2021 = vmatpush1.bf16.msra.mxu0 %v1892
    %2022 = vmatprep.subr.bf16.mxu0 %v1895
    %2023 = vmatpush1.bf16.msra.mxu0 %v1894
    %2024 = vmatprep.subr.bf16.mxu0 %v1897
    %2025 = vmatpush1.bf16.msra.mxu0 %v1896
    %2026 = vmatprep.subr.bf16.mxu0 %v1899
    %2027 = vmatpush1.bf16.msra.mxu0 %v1898
    %2028 = vmatprep.subr.bf16.mxu0 %v1901
    %2029 = vmatpush1.bf16.msra.mxu0 %v1900
    %2030 = vmatprep.subr.bf16.mxu0 %v1903
    %2031 = vmatpush1.bf16.msra.mxu0 %v1902
    %2032 = vmatprep.subr.bf16.mxu0 %v1905
    %2033 = vmatpush1.bf16.msra.mxu0 %v1904
    %2034 = vmatprep.mubr.bf16.mxu0 %v1603
    %2035 = vmatmul.mubr.bf16.gmra.mrb[0].mxu0 %v1602
    %v2036 = vpop.f32.mrb[0].mxu0
    %v2037 = vadd.f32 %v1675, %v2036
    %v2038 = vpop.f32.mrb[0].mxu0
    %v2039 = vadd.f32 %v1679, %v2038
    %v2040 = vpop.f32.mrb[0].mxu0
    %v2041 = vpop.f32.mrb[0].mxu0
    %2042 = vdwg.mxu0
    %2043 = vmatprep.subr.bf16.mxu0 %v1907
    %2044 = vmatpush1.bf16.msra.mxu0 %v1906
    %2045 = vmatprep.subr.bf16.mxu0 %v1909
    %2046 = vmatpush1.bf16.msra.mxu0 %v1908
    %2047 = vmatprep.subr.bf16.mxu0 %v1911
    %2048 = vmatpush1.bf16.msra.mxu0 %v1910
    %2049 = vmatprep.subr.bf16.mxu0 %v1913
    %2050 = vmatpush1.bf16.msra.mxu0 %v1912
    %2051 = vmatprep.subr.bf16.mxu0 %v1915
    %2052 = vmatpush1.bf16.msra.mxu0 %v1914
    %2053 = vmatprep.subr.bf16.mxu0 %v1917
    %2054 = vmatpush1.bf16.msra.mxu0 %v1916
    %2055 = vmatprep.subr.bf16.mxu0 %v1919
    %2056 = vmatpush1.bf16.msra.mxu0 %v1918
    %2057 = vmatprep.subr.bf16.mxu0 %v1921
    %2058 = vmatpush1.bf16.msra.mxu0 %v1920
    %2059 = vmatprep.subr.bf16.mxu0 %v1923
    %2060 = vmatpush1.bf16.msra.mxu0 %v1922
    %2061 = vmatprep.subr.bf16.mxu0 %v1925
    %2062 = vmatpush1.bf16.msra.mxu0 %v1924
    %2063 = vmatprep.subr.bf16.mxu0 %v1927
    %2064 = vmatpush1.bf16.msra.mxu0 %v1926
    %2065 = vmatprep.subr.bf16.mxu0 %v1929
    %2066 = vmatpush1.bf16.msra.mxu0 %v1928
    %2067 = vmatprep.subr.bf16.mxu0 %v1931
    %2068 = vmatpush1.bf16.msra.mxu0 %v1930
    %2069 = vmatprep.subr.bf16.mxu0 %v1933
    %2070 = vmatpush1.bf16.msra.mxu0 %v1932
    %2071 = vmatprep.subr.bf16.mxu0 %v1935
    %2072 = vmatpush1.bf16.msra.mxu0 %v1934
    %2073 = vmatprep.subr.bf16.mxu0 %v1937
    %2074 = vmatpush1.bf16.msra.mxu0 %v1936
    %2075 = vmatprep.mubr.bf16.mxu0 %v1605
    %2076 = vmatmul.mubr.bf16.gmra.mrb[0].mxu0 %v1604
    %v2077 = vpop.f32.mrb[0].mxu0
    %v2078 = vadd.f32 %v2037, %v2077
    %v2079 = vpop.f32.mrb[0].mxu0
    %v2080 = vadd.f32 %v2039, %v2079
    %v2081 = vpop.f32.mrb[0].mxu0
    %v2082 = vpop.f32.mrb[0].mxu0
    %2083 = vdwg.mxu0
    %v2084 = vmax.f32 %v2078, 0.0
    %v2085 = vmax.f32 %v2080, 0.0
    %v2086 = vpack.c.bf16 %v2084, %v2084
    %v2087 = vpack.c.bf16 %v2085, %v2085
    %v2088 = vld [vmem:[%s5] sm:$0xf]
    %v2089 = vld [vmem:[%s5 + $0x4] sm:$0xf]
    %v2090 = vld [vmem:[%s5 + $0x8] sm:$0xf]
    %v2091 = vld [vmem:[%s5 + $0xc] sm:$0xf]
    %v2092 = vld [vmem:[%s5 + $0x10] sm:$0xf]
    %v2093 = vld [vmem:[%s5 + $0x14] sm:$0xf]
    %v2094 = vld [vmem:[%s5 + $0x18] sm:$0xf]
    %v2095 = vld [vmem:[%s5 + $0x1c] sm:$0xf]
    %v2096 = vld [vmem:[%s5 + $0x20] sm:$0xf]
    %v2097 = vld [vmem:[%s5 + $0x24] sm:$0xf]
    %v2098 = vld [vmem:[%s5 + $0x28] sm:$0xf]
    %v2099 = vld [vmem:[%s5 + $0x2c] sm:$0xf]
    %v2100 = vld [vmem:[%s5 + $0x30] sm:$0xf]
    %v2101 = vld [vmem:[%s5 + $0x34] sm:$0xf]
    %v2102 = vld [vmem:[%s5 + $0x38] sm:$0xf]
    %v2103 = vld [vmem:[%s5 + $0x3c] sm:$0xf]
    %v2104 = vld [vmem:[%s5 + $0x40] sm:$0xf]
    %v2105 = vld [vmem:[%s5 + $0x44] sm:$0xf]
    %v2106 = vld [vmem:[%s5 + $0x48] sm:$0xf]
    %v2107 = vld [vmem:[%s5 + $0x4c] sm:$0xf]
    %v2108 = vld [vmem:[%s5 + $0x50] sm:$0xf]
    %v2109 = vld [vmem:[%s5 + $0x54] sm:$0xf]
    %v2110 = vld [vmem:[%s5 + $0x58] sm:$0xf]
    %v2111 = vld [vmem:[%s5 + $0x5c] sm:$0xf]
    %v2112 = vld [vmem:[%s5 + $0x60] sm:$0xf]
    %v2113 = vld [vmem:[%s5 + $0x64] sm:$0xf]
    %v2114 = vld [vmem:[%s5 + $0x68] sm:$0xf]
    %v2115 = vld [vmem:[%s5 + $0x6c] sm:$0xf]
    %v2116 = vld [vmem:[%s5 + $0x70] sm:$0xf]
    %v2117 = vld [vmem:[%s5 + $0x74] sm:$0xf]
    %v2118 = vld [vmem:[%s5 + $0x78] sm:$0xf]
    %v2119 = vld [vmem:[%s5 + $0x7c] sm:$0xf]
    %v2120 = vld [vmem:[%s6] sm:$0x1]
    %v2122 = vlaneseq
    %v2123 = vshrl.u32 %v2122, 7
    %v2124 = vsub.s32 0, %v2123
    %v2125 = vrot.slane %v2120, %v2124
    %v2159 = vunpack.c.l.b16 %v2088
    %v2160 = vunpack.c.l.b16 %v2089
    %v2161 = vunpack.c.l.b16 %v2090
    %v2162 = vunpack.c.l.b16 %v2091
    %v2163 = vunpack.c.l.b16 %v2092
    %v2164 = vunpack.c.l.b16 %v2093
    %v2165 = vunpack.c.l.b16 %v2094
    %v2166 = vunpack.c.l.b16 %v2095
    %v2167 = vunpack.c.l.b16 %v2096
    %v2168 = vunpack.c.l.b16 %v2097
    %v2169 = vunpack.c.l.b16 %v2098
    %v2170 = vunpack.c.l.b16 %v2099
    %v2171 = vunpack.c.l.b16 %v2100
    %v2172 = vunpack.c.l.b16 %v2101
    %v2173 = vunpack.c.l.b16 %v2102
    %v2174 = vunpack.c.l.b16 %v2103
    %v2175 = vunpack.c.l.b16 %v2104
    %v2176 = vunpack.c.l.b16 %v2105
    %v2177 = vunpack.c.l.b16 %v2106
    %v2178 = vunpack.c.l.b16 %v2107
    %v2179 = vunpack.c.l.b16 %v2108
    %v2180 = vunpack.c.l.b16 %v2109
    %v2181 = vunpack.c.l.b16 %v2110
    %v2182 = vunpack.c.l.b16 %v2111
    %v2183 = vunpack.c.l.b16 %v2112
    %v2184 = vunpack.c.l.b16 %v2113
    %v2185 = vunpack.c.l.b16 %v2114
    %v2186 = vunpack.c.l.b16 %v2115
    %v2187 = vunpack.c.l.b16 %v2116
    %v2188 = vunpack.c.l.b16 %v2117
    %v2189 = vunpack.c.l.b16 %v2118
    %v2190 = vunpack.c.l.b16 %v2119
    %v2191 = vpack.c.b16 %v2160, %v2159
    %v2192 = vpack.c.b16 %v2162, %v2161
    %v2193 = vpack.c.b16 %v2164, %v2163
    %v2194 = vpack.c.b16 %v2166, %v2165
    %v2195 = vpack.c.b16 %v2168, %v2167
    %v2196 = vpack.c.b16 %v2170, %v2169
    %v2197 = vpack.c.b16 %v2172, %v2171
    %v2198 = vpack.c.b16 %v2174, %v2173
    %v2199 = vpack.c.b16 %v2176, %v2175
    %v2200 = vpack.c.b16 %v2178, %v2177
    %v2201 = vpack.c.b16 %v2180, %v2179
    %v2202 = vpack.c.b16 %v2182, %v2181
    %v2203 = vpack.c.b16 %v2184, %v2183
    %v2204 = vpack.c.b16 %v2186, %v2185
    %v2205 = vpack.c.b16 %v2188, %v2187
    %v2206 = vpack.c.b16 %v2190, %v2189
    %2223 = vmatprep.subr.bf16.mxu0 0
    %2224 = vmatpush1.bf16.msra.mxu0 %v2191
    %2225 = vmatprep.subr.bf16.mxu0 0
    %2226 = vmatpush1.bf16.msra.mxu0 %v2192
    %2227 = vmatprep.subr.bf16.mxu0 0
    %2228 = vmatpush1.bf16.msra.mxu0 %v2193
    %2229 = vmatprep.subr.bf16.mxu0 0
    %2230 = vmatpush1.bf16.msra.mxu0 %v2194
    %2231 = vmatprep.subr.bf16.mxu0 0
    %2232 = vmatpush1.bf16.msra.mxu0 %v2195
    %2233 = vmatprep.subr.bf16.mxu0 0
    %2234 = vmatpush1.bf16.msra.mxu0 %v2196
    %2235 = vmatprep.subr.bf16.mxu0 0
    %2236 = vmatpush1.bf16.msra.mxu0 %v2197
    %2237 = vmatprep.subr.bf16.mxu0 0
    %2238 = vmatpush1.bf16.msra.mxu0 %v2198
    %2239 = vmatprep.subr.bf16.mxu0 0
    %2240 = vmatpush1.bf16.msra.mxu0 %v2199
    %2241 = vmatprep.subr.bf16.mxu0 0
    %2242 = vmatpush1.bf16.msra.mxu0 %v2200
    %2243 = vmatprep.subr.bf16.mxu0 0
    %2244 = vmatpush1.bf16.msra.mxu0 %v2201
    %2245 = vmatprep.subr.bf16.mxu0 0
    %2246 = vmatpush1.bf16.msra.mxu0 %v2202
    %2247 = vmatprep.subr.bf16.mxu0 0
    %2248 = vmatpush1.bf16.msra.mxu0 %v2203
    %2249 = vmatprep.subr.bf16.mxu0 0
    %2250 = vmatpush1.bf16.msra.mxu0 %v2204
    %2251 = vmatprep.subr.bf16.mxu0 0
    %2252 = vmatpush1.bf16.msra.mxu0 %v2205
    %2253 = vmatprep.subr.bf16.mxu0 0
    %2254 = vmatpush1.bf16.msra.mxu0 %v2206
    %2255 = vmatprep.mubr.bf16.mxu0 %v2087
    %2256 = vmatmul.mubr.bf16.gmra.mrb[0].mxu0 %v2086
    %v2257 = vpop.f32.mrb[0].mxu0
    %v2258 = vadd.f32 %v2125, %v2257
    %v2259 = vpop.f32.mrb[0].mxu0
    %v2260 = vpop.f32.mrb[0].mxu0
    %v2261 = vpop.f32.mrb[0].mxu0
    %2262 = vdwg.mxu0
    %v2263 = vmax.f32 %v2258, 0.0
    %v2264 = vpack.c.bf16 %v2263, %v2263
    %v2265 = vld [vmem:[%s7] sm:$0xf]
    %v2266 = vld [vmem:[%s7 + $0x4] sm:$0xf]
    %v2267 = vld [vmem:[%s7 + $0x8] sm:$0xf]
    %v2268 = vld [vmem:[%s7 + $0xc] sm:$0xf]
    %v2269 = vld [vmem:[%s7 + $0x10] sm:$0xf]
    %v2270 = vld [vmem:[%s7 + $0x14] sm:$0xf]
    %v2271 = vld [vmem:[%s7 + $0x18] sm:$0xf]
    %v2272 = vld [vmem:[%s7 + $0x1c] sm:$0xf]
    %v2273 = vld [vmem:[%s7 + $0x20] sm:$0xf]
    %v2274 = vld [vmem:[%s7 + $0x24] sm:$0xf]
    %v2275 = vld [vmem:[%s7 + $0x28] sm:$0xf]
    %v2276 = vld [vmem:[%s7 + $0x2c] sm:$0xf]
    %v2277 = vld [vmem:[%s7 + $0x30] sm:$0xf]
    %v2278 = vld [vmem:[%s7 + $0x34] sm:$0xf]
    %v2279 = vld [vmem:[%s7 + $0x38] sm:$0xf]
    %v2280 = vld [vmem:[%s7 + $0x3c] sm:$0xf]
    %v2281 = vld [vmem:[%s8] sm:$0x1]
    %v2283 = vlaneseq
    %v2284 = vshrl.u32 %v2283, 7
    %v2285 = vsub.s32 0, %v2284
    %v2286 = vrot.slane %v2281, %v2285
    %v2304 = vunpack.c.l.b16 %v2265
    %v2305 = vunpack.c.l.b16 %v2266
    %v2306 = vunpack.c.l.b16 %v2267
    %v2307 = vunpack.c.l.b16 %v2268
    %v2308 = vunpack.c.l.b16 %v2269
    %v2309 = vunpack.c.l.b16 %v2270
    %v2310 = vunpack.c.l.b16 %v2271
    %v2311 = vunpack.c.l.b16 %v2272
    %v2312 = vunpack.c.l.b16 %v2273
    %v2313 = vunpack.c.l.b16 %v2274
    %v2314 = vunpack.c.l.b16 %v2275
    %v2315 = vunpack.c.l.b16 %v2276
    %v2316 = vunpack.c.l.b16 %v2277
    %v2317 = vunpack.c.l.b16 %v2278
    %v2318 = vunpack.c.l.b16 %v2279
    %v2319 = vunpack.c.l.b16 %v2280
    %v2320 = vpack.c.b16 %v2305, %v2304
    %v2321 = vpack.c.b16 %v2307, %v2306
    %v2322 = vpack.c.b16 %v2309, %v2308
    %v2323 = vpack.c.b16 %v2311, %v2310
    %v2324 = vpack.c.b16 %v2313, %v2312
    %v2325 = vpack.c.b16 %v2315, %v2314
    %v2326 = vpack.c.b16 %v2317, %v2316
    %v2327 = vpack.c.b16 %v2319, %v2318
    %2336 = vmatprep.subr.bf16.mxu0 0
    %2337 = vmatpush1.bf16.msra.mxu0 %v2320
    %2338 = vmatprep.subr.bf16.mxu0 0
    %2339 = vmatpush1.bf16.msra.mxu0 %v2321
    %2340 = vmatprep.subr.bf16.mxu0 0
    %2341 = vmatpush1.bf16.msra.mxu0 %v2322
    %2342 = vmatprep.subr.bf16.mxu0 0
    %2343 = vmatpush1.bf16.msra.mxu0 %v2323
    %2344 = vmatprep.subr.bf16.mxu0 0
    %2345 = vmatpush1.bf16.msra.mxu0 %v2324
    %2346 = vmatprep.subr.bf16.mxu0 0
    %2347 = vmatpush1.bf16.msra.mxu0 %v2325
    %2348 = vmatprep.subr.bf16.mxu0 0
    %2349 = vmatpush1.bf16.msra.mxu0 %v2326
    %2350 = vmatprep.subr.bf16.mxu0 0
    %2351 = vmatpush1.bf16.msra.mxu0 %v2327
    %2352 = vmatprep.subr.bf16.mxu0 0
    %2353 = vmatpush1.bf16.msra.mxu0 0
    %2354 = vmatprep.subr.bf16.mxu0 0
    %2355 = vmatpush1.bf16.msra.mxu0 0
    %2356 = vmatprep.subr.bf16.mxu0 0
    %2357 = vmatpush1.bf16.msra.mxu0 0
    %2358 = vmatprep.subr.bf16.mxu0 0
    %2359 = vmatpush1.bf16.msra.mxu0 0
    %2360 = vmatprep.subr.bf16.mxu0 0
    %2361 = vmatpush1.bf16.msra.mxu0 0
    %2362 = vmatprep.subr.bf16.mxu0 0
    %2363 = vmatpush1.bf16.msra.mxu0 0
    %2364 = vmatprep.subr.bf16.mxu0 0
    %2365 = vmatpush1.bf16.msra.mxu0 0
    %2366 = vmatprep.subr.bf16.mxu0 0
    %2367 = vmatpush1.bf16.msra.mxu0 0
    %2368 = vmatprep.mubr.bf16.mxu0 0
    %2369 = vmatmul.mubr.bf16.gmra.mrb[0].mxu0 %v2264
    %v2370 = vpop.f32.mrb[0].mxu0
    %v2371 = vadd.f32 %v2286, %v2370
    %v2372 = vpop.f32.mrb[0].mxu0
    %v2373 = vpop.f32.mrb[0].mxu0
    %v2374 = vpop.f32.mrb[0].mxu0
    %2375 = vdwg.mxu0
    %v2376 = vmax.f32 %v2371, 0.0
    %v2377 = vpack.c.bf16 %v2376, %v2376
    %v2378 = vld [vmem:[%s9] sm:$0xf]
    %v2379 = vld [vmem:[%s9 + $0x4] sm:$0xf]
    %v2380 = vld [vmem:[%s9 + $0x8] sm:$0xf]
    %v2381 = vld [vmem:[%s9 + $0xc] sm:$0xf]
    %v2382 = vld [vmem:[%s9 + $0x10] sm:$0xf]
    %v2383 = vld [vmem:[%s9 + $0x14] sm:$0xf]
    %v2384 = vld [vmem:[%s9 + $0x18] sm:$0xf]
    %v2385 = vld [vmem:[%s9 + $0x1c] sm:$0xf]
    %v2386 = vld [vmem:[%s9 + $0x20] sm:$0xf]
    %v2387 = vld [vmem:[%s9 + $0x24] sm:$0xf]
    %v2388 = vld [vmem:[%s9 + $0x28] sm:$0xf]
    %v2389 = vld [vmem:[%s9 + $0x2c] sm:$0xf]
    %v2390 = vld [vmem:[%s9 + $0x30] sm:$0xf]
    %v2391 = vld [vmem:[%s9 + $0x34] sm:$0xf]
    %v2392 = vld [vmem:[%s9 + $0x38] sm:$0xf]
    %v2393 = vld [vmem:[%s9 + $0x3c] sm:$0xf]
    %v2394 = vld [vmem:[%s10] sm:$0x1]
    %v2396 = vlaneseq
    %v2397 = vshrl.u32 %v2396, 7
    %v2398 = vsub.s32 0, %v2397
    %v2399 = vrot.slane %v2394, %v2398
    %v2417 = vunpack.c.l.b16 %v2378
    %v2418 = vunpack.c.l.b16 %v2379
    %v2419 = vunpack.c.l.b16 %v2380
    %v2420 = vunpack.c.l.b16 %v2381
    %v2421 = vunpack.c.l.b16 %v2382
    %v2422 = vunpack.c.l.b16 %v2383
    %v2423 = vunpack.c.l.b16 %v2384
    %v2424 = vunpack.c.l.b16 %v2385
    %v2425 = vunpack.c.l.b16 %v2386
    %v2426 = vunpack.c.l.b16 %v2387
    %v2427 = vunpack.c.l.b16 %v2388
    %v2428 = vunpack.c.l.b16 %v2389
    %v2429 = vunpack.c.l.b16 %v2390
    %v2430 = vunpack.c.l.b16 %v2391
    %v2431 = vunpack.c.l.b16 %v2392
    %v2432 = vunpack.c.l.b16 %v2393
    %v2433 = vpack.c.b16 %v2418, %v2417
    %v2434 = vpack.c.b16 %v2420, %v2419
    %v2435 = vpack.c.b16 %v2422, %v2421
    %v2436 = vpack.c.b16 %v2424, %v2423
    %v2437 = vpack.c.b16 %v2426, %v2425
    %v2438 = vpack.c.b16 %v2428, %v2427
    %v2439 = vpack.c.b16 %v2430, %v2429
    %v2440 = vpack.c.b16 %v2432, %v2431
    %2449 = vmatprep.subr.bf16.mxu0 0
    %2450 = vmatpush1.bf16.msra.mxu0 %v2433
    %2451 = vmatprep.subr.bf16.mxu0 0
    %2452 = vmatpush1.bf16.msra.mxu0 %v2434
    %2453 = vmatprep.subr.bf16.mxu0 0
    %2454 = vmatpush1.bf16.msra.mxu0 %v2435
    %2455 = vmatprep.subr.bf16.mxu0 0
    %2456 = vmatpush1.bf16.msra.mxu0 %v2436
    %2457 = vmatprep.subr.bf16.mxu0 0
    %2458 = vmatpush1.bf16.msra.mxu0 %v2437
    %2459 = vmatprep.subr.bf16.mxu0 0
    %2460 = vmatpush1.bf16.msra.mxu0 %v2438
    %2461 = vmatprep.subr.bf16.mxu0 0
    %2462 = vmatpush1.bf16.msra.mxu0 %v2439
    %2463 = vmatprep.subr.bf16.mxu0 0
    %2464 = vmatpush1.bf16.msra.mxu0 %v2440
    %2465 = vmatprep.subr.bf16.mxu0 0
    %2466 = vmatpush1.bf16.msra.mxu0 0
    %2467 = vmatprep.subr.bf16.mxu0 0
    %2468 = vmatpush1.bf16.msra.mxu0 0
    %2469 = vmatprep.subr.bf16.mxu0 0
    %2470 = vmatpush1.bf16.msra.mxu0 0
    %2471 = vmatprep.subr.bf16.mxu0 0
    %2472 = vmatpush1.bf16.msra.mxu0 0
    %2473 = vmatprep.subr.bf16.mxu0 0
    %2474 = vmatpush1.bf16.msra.mxu0 0
    %2475 = vmatprep.subr.bf16.mxu0 0
    %2476 = vmatpush1.bf16.msra.mxu0 0
    %2477 = vmatprep.subr.bf16.mxu0 0
    %2478 = vmatpush1.bf16.msra.mxu0 0
    %2479 = vmatprep.subr.bf16.mxu0 0
    %2480 = vmatpush1.bf16.msra.mxu0 0
    %2481 = vmatprep.mubr.bf16.mxu0 0
    %2482 = vmatmul.mubr.bf16.gmra.mrb[0].mxu0 %v2377
    %v2483 = vpop.f32.mrb[0].mxu0
    %v2484 = vadd.f32 %v2399, %v2483
    %v2485 = vpop.f32.mrb[0].mxu0
    %v2486 = vpop.f32.mrb[0].mxu0
    %v2487 = vpop.f32.mrb[0].mxu0
    %2488 = vdwg.mxu0
    %2489 = vst [vmem:[#allocation5] sm:$0xff] %v2484
    // Predicated region
    $region50: #{net_forward.1} parent=1 // pred_check
      _
    $region51: #{net_forward.1} parent=1 // pred_check_branch
      %2491 = sbr.rel (0) target = $region53
    $region52: #{net_forward.1} parent=1 // pred_region
      %s2493 = ssub.s32 128, 128
      %2494 = vsyncadd [#allocation4], %s2493
      %s2496 = sshll.u32 [#allocation5], 4
      %s2497 = int_to_ptr.vmem [resolvable:$true] %s2496
      %2499 = dma.vmem_to_hbm [thread:$0]  %s2497, 128, %s11, [#allocation4]
    $region53: #{net_forward.1} parent=1 // pred_fallthru
      _
    // Predicated region
    $region54: #{net_forward.1} parent=1 // pred_check
      _
    $region55: #{net_forward.1} parent=1 // pred_check_branch
      %2501 = sbr.rel (0) target = $region57
    $region56: #{net_forward.1} parent=1 // pred_region
      %2502 = dma.done [#allocation4], 128
    $region57: #{net_forward.1} parent=1 // pred_fallthru
      _
    %2503 = vsyncpa [#allocation3], 1
    %2504 = vsyncpa [#allocation4], 1

</llo_original>
